<compile_context>
chip_gen: v6e
topology: v6e:2x2x1
jax: 0.10.0
libtpu: 0.0.40
codegen_flags: <defaults>
</compile_context>

<pallas_src>
import math
import functools
from types import SimpleNamespace

import jax
import jax.numpy as jnp
from jax import lax
from jax.experimental import pallas as pl
from jax.experimental.pallas import tpu as pltpu


# ----------------------------------------------------------------------------
# Single fused kernel: TR layers -> alias gather -> conv-attention -> intent
# ----------------------------------------------------------------------------
def _model_kernel(items_ref, adj_ref, adjt_ref, alias_ref, pos_ref, gmask_ref,
                  mask_ref, trw_ref, trb_ref,
                  wq_ref, bq_ref, wk_ref, bk_ref, wv_ref, bv_ref,
                  w1_ref, b1_ref, w2_ref, w3_ref, w4_ref, wbeta_ref, bbeta_ref,
                  out_ref, pad_scr,
                  *, tr_layers, ksize, leaky_alpha, inv_sqrt_dk):
    f32 = jnp.float32
    NEG = -9e15  # plain Python float -> literal, not a captured constant

    def leaky(v):
        return jnp.where(v >= 0.0, v, leaky_alpha * v)

    # -------------------- TRLayer.aggregate (all layers, VMEM-resident) -------
    h = items_ref[...]                                   # (BB, U, D)
    BB, U, D = h.shape
    adj = adj_ref[...]                                   # (BB, U, U)
    adj_t = adjt_ref[...]                                # adj transposed (precomputed)
    wi = trw_ref[:, :D].reshape(1, 1, D)                 # linear1 weight, h_i half
    wj = trw_ref[:, D:].reshape(1, 1, D)                 # linear1 weight, h_j half
    bias = trb_ref[0, 0]                                 # scalar bias from SMEM
    wi_b = jnp.broadcast_to(wi, (BB, 1, D))              # hoisted out of the layer loop
    wj_b = jnp.broadcast_to(wj, (BB, 1, D))
    no_edge = (adj + adj_t) == 0.0

    for _ in range(tr_layers):
        # attn[b,i,j] = wi.h_i + wj.h_j + bias, built transpose-free.
        ai_col = jnp.sum(h * wi, axis=-1, keepdims=True)                      # (BB,U,1)
        aj_col = jnp.sum(h * wj, axis=-1, keepdims=True)                      # (BB,U,1)
        ai_row = jnp.einsum('bod,bud->bou', wi_b, h,
                            preferred_element_type=f32)                       # (BB,1,U)
        aj_row = jnp.einsum('bod,bud->bou', wj_b, h,
                            preferred_element_type=f32)                       # (BB,1,U)
        attn = jnp.tanh(ai_col + aj_row + bias)                               # (BB,U,U)
        attn_T = jnp.tanh(aj_col + ai_row + bias)                             # == attn^T
        alpha = 0.5 * (jnp.where(adj == 1.0, attn, 0.0)
                       + jnp.where(adj_t == 1.0, attn_T, 0.0))
        alpha = jnp.where(no_edge, NEG, alpha)
        alpha = alpha - jnp.max(alpha, axis=-1, keepdims=True)
        e = jnp.exp(alpha)
        alpha = e / jnp.sum(e, axis=-1, keepdims=True)
        h = jnp.einsum('bij,bjd->bid', alpha, h, preferred_element_type=f32)

    # -------------------- alias gather: hidden[b, alias[b, l], :] -------------
    alias = alias_ref[...]                               # (BB, L, 1) int32
    L = alias.shape[1]
    u_iota = lax.broadcasted_iota(jnp.int32, (BB, L, U), 2)
    sel = (alias == u_iota).astype(f32)                  # one-hot rows (BB, L, U)
    hidden = jnp.einsum('blu,bud->bld', sel, h, preferred_element_type=f32)   # (BB,L,D)

    # -------------------- depthwise conv q/k/v over positional embeddings -----
    x = pos_ref[...]                                     # (BB, L, D)
    pad = ksize // 2
    pad_scr[...] = jnp.zeros_like(pad_scr)               # zero-padded copy of x
    pad_scr[:, pad:pad + L, :] = x
    acc_q = jnp.zeros((BB, L, D), f32)
    acc_k = jnp.zeros((BB, L, D), f32)
    acc_v = jnp.zeros((BB, L, D), f32)
    for t in range(ksize):                               # shifted view shared by q/k/v
        shifted = pad_scr[:, t:t + L, :]                 # static slice = zero-padded shift
        acc_q = acc_q + shifted * wq_ref[t:t + 1, :].reshape(1, 1, D)
        acc_k = acc_k + shifted * wk_ref[t:t + 1, :].reshape(1, 1, D)
        acc_v = acc_v + shifted * wv_ref[t:t + 1, :].reshape(1, 1, D)
    pq = leaky(acc_q + bq_ref[...].reshape(1, 1, D))
    pk = leaky(acc_k + bk_ref[...].reshape(1, 1, D))
    pv = leaky(acc_v + bv_ref[...].reshape(1, 1, D))

    # -------------------- masked scaled-dot-product attention -----------------
    # NOTE: reference uses dk = pos_emb.size(-1) AFTER permute(0,2,1), i.e. dk = L.
    s = jnp.einsum('bqd,bkd->bqk', pq, pk, preferred_element_type=f32) * inv_sqrt_dk
    s = jnp.where(gmask_ref[...] == 0.0, NEG, s)
    s = s - jnp.max(s, axis=-1, keepdims=True)
    e = jnp.exp(s)
    p_alpha = e / jnp.sum(e, axis=-1, keepdims=True)
    pos_att = jnp.einsum('bqk,bkd->bqd', p_alpha, pv, preferred_element_type=f32)

    # TODO(synk): F.dropout runs with p=opt.dropout=0.0 -> identity (deterministic).
    nh = hidden + pos_att                                # (BB, L, D)

    # -------------------- h_n / hs / 4-way linear combine ----------------------
    m = mask_ref[...]                                    # (BB, L, 1) float {0,1}
    msum = jnp.sum(m, axis=1, keepdims=True)             # (BB, 1, 1)
    last_idx = msum.astype(jnp.int32) - 1
    rows = lax.broadcasted_iota(jnp.int32, (BB, L, 1), 1)
    sel_last = (rows == last_idx).astype(f32)
    h_n = jnp.sum(nh * sel_last, axis=1, keepdims=True)  # (BB,1,D) = nh[b, sum(mask)-1]
    hs = jnp.sum(nh * m, axis=1, keepdims=True) / msum   # (BB,1,D) masked mean

    w1b = jnp.broadcast_to(w1_ref[...].reshape(1, D, D), (BB, D, D))
    w2b = jnp.broadcast_to(w2_ref[...].reshape(1, D, D), (BB, D, D))
    w3b = jnp.broadcast_to(w3_ref[...].reshape(1, D, D), (BB, D, D))
    w4b = jnp.broadcast_to(w4_ref[...].reshape(1, D, D), (BB, D, D))
    row_terms = (jnp.einsum('bod,bde->boe', hs, w2b, preferred_element_type=f32)
                 + jnp.einsum('bod,bde->boe', h_n, w3b, preferred_element_type=f32)
                 + jnp.einsum('bod,bde->boe', jnp.where(hs > h_n, hs, h_n), w4b,
                              preferred_element_type=f32))                    # (BB,1,D)
    z = (jnp.einsum('bld,bde->ble', nh, w1b, preferred_element_type=f32)
         + b1_ref[...].reshape(1, 1, D) + row_terms)
    nh2 = leaky(z)                                       # (BB, L, D)

    # beta = nh2 @ w_2 (D->1) + b_2 ((D,) broadcast over channels, as in the
    # reference where (B,L,1)+(D,) -> (B,L,D)), gated by the mask.
    beta = (jnp.sum(nh2 * wbeta_ref[...].reshape(1, 1, D), axis=-1, keepdims=True)
            + bbeta_ref[...].reshape(1, 1, D)) * m       # (BB, L, D)
    out_ref[...] = jnp.sum(beta * hidden, axis=1)        # (BB, D) lane-dense slab


def fused_forward(items_h, adj, adj_t, alias3, pos_emb, gmask, mask_col, params,
                  tr_layers, ksize, leaky_alpha, batch_block=None):
    B, U, D = items_h.shape
    L = alias3.shape[1]
    BB = B if batch_block is None else batch_block
    assert B % BB == 0, "batch_block must divide the batch size"
    pad = ksize // 2

    kern = functools.partial(_model_kernel, tr_layers=tr_layers, ksize=ksize,
                             leaky_alpha=leaky_alpha, inv_sqrt_dk=1.0 / math.sqrt(L))

    def batch_spec(shape):
        nd = len(shape)
        return pl.BlockSpec(shape, lambda b, _nd=nd: (b,) + (0,) * (_nd - 1))

    def const_spec(arr):
        nd = arr.ndim
        return pl.BlockSpec(arr.shape, lambda b, _nd=nd: (0,) * _nd)

    weights = [params["conv_q_w"], params["conv_q_b"],
               params["conv_k_w"], params["conv_k_b"],
               params["conv_v_w"], params["conv_v_b"],
               params["w1"], params["b1"],
               params["w2"], params["w3"], params["w4"],
               params["w_2"], params["b_2"]]

    in_specs = ([batch_spec((BB, U, D)),                 # items_h
                 batch_spec((BB, U, U)),                 # adj (out-edges)
                 batch_spec((BB, U, U)),                 # adj transposed (in-edges)
                 batch_spec((BB, L, 1)),                 # alias_inputs
                 batch_spec((BB, L, D)),                 # positional embeddings
                 batch_spec((BB, L, L)),                 # graph mask
                 batch_spec((BB, L, 1)),                 # sequence mask
                 const_spec(params["tr_w"]),             # TR linear1 weight (1, 2D)
                 pl.BlockSpec(memory_space=pltpu.MemorySpace.SMEM)]  # TR linear1 bias (scalar)
                + [const_spec(w) for w in weights])

    return pl.pallas_call(
        kern,
        out_shape=jax.ShapeDtypeStruct((B, D), jnp.float32),
        grid=(B // BB,),
        in_specs=in_specs,
        out_specs=pl.BlockSpec((BB, D), lambda b: (b, 0)),
        scratch_shapes=[pltpu.VMEM((BB, L + 2 * pad, D), jnp.float32)],
        compiler_params=pltpu.CompilerParams(dimension_semantics=("parallel",)),
    )(items_h, adj, adj_t, alias3, pos_emb, gmask, mask_col,
      params["tr_w"], params["tr_b"], *weights)


# ----------------------------------------------------------------------------
# Full forward (glue in plain JAX under jit, hot path in the fused kernel)
# ----------------------------------------------------------------------------
@functools.partial(jax.jit, static_argnames=("tr_layers", "ksize", "leaky_alpha"))
def model_forward(params, mask, adj, items, alias_inputs, pos, graph_mask,
                  *, tr_layers, ksize, leaky_alpha):
    items_h = params["embedding"][items].astype(jnp.float32)        # (B, U, D)
    pos_emb = params["pos_embedding"][pos].astype(jnp.float32)      # (B, L, D)
    adj_f = adj.astype(jnp.float32)
    adj_t = jnp.swapaxes(adj_f, -1, -2)
    alias3 = alias_inputs.astype(jnp.int32)[:, :, None]              # (B, L, 1)
    mask_col = mask.astype(jnp.float32)[:, :, None]                  # (B, L, 1)
    gmask = graph_mask.astype(jnp.float32)                           # (B, L, L)
    return fused_forward(items_h, adj_f, adj_t, alias3, pos_emb, gmask, mask_col,
                         params, tr_layers, ksize, leaky_alpha)      # (B, D)


def init_params(key, num_node, pos_len, D, K):
    stand = 1.0 / math.sqrt(D)
    keys = jax.random.split(key, 17)
    u = lambda k, shape: jax.random.uniform(k, shape, jnp.float32, -stand, stand)
    return dict(
        embedding=u(keys[0], (num_node, D)),          # nn.Embedding(num_node, D)
        pos_embedding=u(keys[1], (pos_len, D)),       # nn.Embedding(pos_len, D)
        tr_w=u(keys[2], (1, 2 * D)),                  # TRLayer.linear1 weight (1, 2D)
        tr_b=u(keys[3], (1, 1)),                      # TRLayer.linear1 bias (scalar)
        conv_q_w=u(keys[4], (K, D)), conv_q_b=u(keys[5], (1, D)),   # depthwise conv taps
        conv_k_w=u(keys[6], (K, D)), conv_k_b=u(keys[7], (1, D)),
        conv_v_w=u(keys[8], (K, D)), conv_v_b=u(keys[9], (1, D)),
        w1=u(keys[10], (D, D)), b1=u(keys[11], (1, D)),             # linear1 (in x out)
        w2=u(keys[12], (D, D)), w3=u(keys[13], (D, D)), w4=u(keys[14], (D, D)),
        w_2=u(keys[15], (1, D)),                      # w_2 (D, 1) stored as a row
        b_2=u(keys[16], (1, D)),                      # b_2 (D,) stored as a row
    )


if __name__ == "__main__":
    opt = SimpleNamespace(tr_layer=1, hidden_size=32, pos_len=16, batch_size=2,
                          dropout=0.0, alpha=0.2, kernel_size=3, smooth=None,
                          lr=1e-3, lr_step=3, lr_dc=0.1)
    B, U, L, D = 2, 8, 8, opt.hidden_size
    num_node = 20

    key = jax.random.PRNGKey(0)
    kp, k1, k2, k3 = jax.random.split(key, 4)
    params = init_params(kp, num_node, opt.pos_len, D, opt.kernel_size)

    items = jax.random.randint(k1, (B, U), 1, num_node)                       # (B, U)
    adj = jax.random.bernoulli(k2, 0.4, (B, U, U)).astype(jnp.float32)        # (B, U, U)
    alias_inputs = jax.random.randint(k3, (B, L), 0, U)                       # (B, L)
    pos = jnp.tile(jnp.arange(L, dtype=jnp.int32), (B, 1)) % opt.pos_len      # (B, L)
    mask = jnp.array([[1] * 5 + [0] * 3, [1] * 8], dtype=jnp.int32)           # (B, L)
    graph_mask = (mask[:, :, None] * mask[:, None, :]).astype(jnp.float32)    # (B, L, L)

    intent = model_forward(params, mask, adj, items, alias_inputs, pos, graph_mask,
                           tr_layers=opt.tr_layer, ksize=opt.kernel_size,
                           leaky_alpha=opt.alpha)
    intent = jax.block_until_ready(intent)
    assert intent.shape == (B, D) and bool(jnp.all(jnp.isfinite(intent)))
    print("KERNEL_OK")
</pallas_src>

<mosaic_0001>
module attributes {stable_mosaic.version = 11 : i64} {
  func.func @_model_kernel(%arg0: i32, %arg1: memref<2x8x32xf32, #tpu.memory_space<vmem>>, %arg2: memref<2x8x8xf32, #tpu.memory_space<vmem>>, %arg3: memref<2x8x8xf32, #tpu.memory_space<vmem>>, %arg4: memref<2x8x1xi32, #tpu.memory_space<vmem>>, %arg5: memref<2x8x32xf32, #tpu.memory_space<vmem>>, %arg6: memref<2x8x8xf32, #tpu.memory_space<vmem>>, %arg7: memref<2x8x1xf32, #tpu.memory_space<vmem>>, %arg8: memref<1x64xf32, #tpu.memory_space<vmem>>, %arg9: memref<1x1xf32, #tpu.memory_space<smem>>, %arg10: memref<3x32xf32, #tpu.memory_space<vmem>>, %arg11: memref<1x32xf32, #tpu.memory_space<vmem>>, %arg12: memref<3x32xf32, #tpu.memory_space<vmem>>, %arg13: memref<1x32xf32, #tpu.memory_space<vmem>>, %arg14: memref<3x32xf32, #tpu.memory_space<vmem>>, %arg15: memref<1x32xf32, #tpu.memory_space<vmem>>, %arg16: memref<32x32xf32, #tpu.memory_space<vmem>>, %arg17: memref<1x32xf32, #tpu.memory_space<vmem>>, %arg18: memref<32x32xf32, #tpu.memory_space<vmem>>, %arg19: memref<32x32xf32, #tpu.memory_space<vmem>>, %arg20: memref<32x32xf32, #tpu.memory_space<vmem>>, %arg21: memref<1x32xf32, #tpu.memory_space<vmem>>, %arg22: memref<1x32xf32, #tpu.memory_space<vmem>>, %arg23: memref<2x32xf32, #tpu.memory_space<vmem>>, %arg24: memref<2x10x32xf32, #tpu.memory_space<vmem>>) attributes {dimension_semantics = [#tpu.dimension_semantics<parallel>], iteration_bounds = array<i64: 1>, scalar_prefetch = 0 : i64, scratch_operands = 1 : i64, tpu.core_type = #tpu.core_type<tc>, window_params = [{transform_indices = @transform_0, window_bounds = array<i64: 2, 8, 32>}, {transform_indices = @transform_1, window_bounds = array<i64: 2, 8, 8>}, {transform_indices = @transform_2, window_bounds = array<i64: 2, 8, 8>}, {transform_indices = @transform_3, window_bounds = array<i64: 2, 8, 1>}, {transform_indices = @transform_4, window_bounds = array<i64: 2, 8, 32>}, {transform_indices = @transform_5, window_bounds = array<i64: 2, 8, 8>}, {transform_indices = @transform_6, window_bounds = array<i64: 2, 8, 1>}, {pipeline_mode = #tpu.pipeline_mode<synchronous>, transform_indices = @transform_7, window_bounds = array<i64: 1, 64>}, {transform_indices = @transform_8, window_bounds = array<i64: 1, 1>}, {pipeline_mode = #tpu.pipeline_mode<synchronous>, transform_indices = @transform_9, window_bounds = array<i64: 3, 32>}, {pipeline_mode = #tpu.pipeline_mode<synchronous>, transform_indices = @transform_10, window_bounds = array<i64: 1, 32>}, {pipeline_mode = #tpu.pipeline_mode<synchronous>, transform_indices = @transform_11, window_bounds = array<i64: 3, 32>}, {pipeline_mode = #tpu.pipeline_mode<synchronous>, transform_indices = @transform_12, window_bounds = array<i64: 1, 32>}, {pipeline_mode = #tpu.pipeline_mode<synchronous>, transform_indices = @transform_13, window_bounds = array<i64: 3, 32>}, {pipeline_mode = #tpu.pipeline_mode<synchronous>, transform_indices = @transform_14, window_bounds = array<i64: 1, 32>}, {pipeline_mode = #tpu.pipeline_mode<synchronous>, transform_indices = @transform_15, window_bounds = array<i64: 32, 32>}, {pipeline_mode = #tpu.pipeline_mode<synchronous>, transform_indices = @transform_16, window_bounds = array<i64: 1, 32>}, {pipeline_mode = #tpu.pipeline_mode<synchronous>, transform_indices = @transform_17, window_bounds = array<i64: 32, 32>}, {pipeline_mode = #tpu.pipeline_mode<synchronous>, transform_indices = @transform_18, window_bounds = array<i64: 32, 32>}, {pipeline_mode = #tpu.pipeline_mode<synchronous>, transform_indices = @transform_19, window_bounds = array<i64: 32, 32>}, {pipeline_mode = #tpu.pipeline_mode<synchronous>, transform_indices = @transform_20, window_bounds = array<i64: 1, 32>}, {pipeline_mode = #tpu.pipeline_mode<synchronous>, transform_indices = @transform_21, window_bounds = array<i64: 1, 32>}, {transform_indices = @transform_22, window_bounds = array<i64: 2, 32>}]} {
    %c0 = arith.constant 0 : index
    %c0_0 = arith.constant 0 : index
    %c0_1 = arith.constant 0 : index
    %0 = vector.load %arg1[%c0, %c0_0, %c0_1] : memref<2x8x32xf32, #tpu.memory_space<vmem>>, vector<2x8x32xf32>
    %c0_2 = arith.constant 0 : index
    %c0_3 = arith.constant 0 : index
    %c0_4 = arith.constant 0 : index
    %1 = vector.load %arg2[%c0_2, %c0_3, %c0_4] : memref<2x8x8xf32, #tpu.memory_space<vmem>>, vector<2x8x8xf32>
    %c0_5 = arith.constant 0 : index
    %c0_6 = arith.constant 0 : index
    %c0_7 = arith.constant 0 : index
    %2 = vector.load %arg3[%c0_5, %c0_6, %c0_7] : memref<2x8x8xf32, #tpu.memory_space<vmem>>, vector<2x8x8xf32>
    %c0_8 = arith.constant 0 : index
    %c0_9 = arith.constant 0 : index
    %3 = vector.load %arg8[%c0_8, %c0_9] : memref<1x64xf32, #tpu.memory_space<vmem>>, vector<1x32xf32>
    %4 = vector.shape_cast %3 : vector<1x32xf32> to vector<1x1x32xf32>
    %c0_10 = arith.constant 0 : index
    %c32 = arith.constant 32 : index
    %5 = vector.load %arg8[%c0_10, %c32] : memref<1x64xf32, #tpu.memory_space<vmem>>, vector<1x32xf32>
    %6 = vector.shape_cast %5 : vector<1x32xf32> to vector<1x1x32xf32>
    %c0_11 = arith.constant 0 : index
    %c0_12 = arith.constant 0 : index
    %7 = memref.load %arg9[%c0_11, %c0_12] : memref<1x1xf32, #tpu.memory_space<smem>>
    %8 = vector.shape_cast %4 : vector<1x1x32xf32> to vector<1x1x32xf32>
    %9 = vector.broadcast %8 : vector<1x1x32xf32> to vector<2x1x32xf32>
    %10 = vector.shape_cast %6 : vector<1x1x32xf32> to vector<1x1x32xf32>
    %11 = vector.broadcast %10 : vector<1x1x32xf32> to vector<2x1x32xf32>
    %12 = arith.addf %1, %2 : vector<2x8x8xf32>
    %cst = arith.constant 0.000000e+00 : f32
    %13 = vector.broadcast %cst : f32 to vector<2x8x8xf32>
    %14 = arith.cmpf oeq, %12, %13 : vector<2x8x8xf32>
    %15 = vector.broadcast %4 : vector<1x1x32xf32> to vector<2x8x32xf32>
    %16 = arith.mulf %0, %15 : vector<2x8x32xf32>
    %cst_13 = arith.constant dense<0.000000e+00> : vector<2x8xf32>
    %17 = vector.multi_reduction <add>, %16, %cst_13 [2] : vector<2x8x32xf32> to vector<2x8xf32>
    %18 = vector.shape_cast %17 : vector<2x8xf32> to vector<2x8x1xf32>
    %19 = vector.broadcast %6 : vector<1x1x32xf32> to vector<2x8x32xf32>
    %20 = arith.mulf %0, %19 : vector<2x8x32xf32>
    %cst_14 = arith.constant dense<0.000000e+00> : vector<2x8xf32>
    %21 = vector.multi_reduction <add>, %20, %cst_14 [2] : vector<2x8x32xf32> to vector<2x8xf32>
    %22 = vector.shape_cast %21 : vector<2x8xf32> to vector<2x8x1xf32>
    "tpu.trace_start"() <{level = 10 : i32, message = "bod,bud->bou"}> : () -> ()
    %cst_15 = arith.constant dense<0.000000e+00> : vector<2x1x8xf32>
    %23 = tpu.matmul %9, %0, %cst_15 {dimension_numbers = #tpu.dot_dimension_numbers<[2], [2], [1], [1], [0, 0, 0, 1, 1, 1], [0], [0]>} : vector<2x1x32xf32>, vector<2x8x32xf32>, vector<2x1x8xf32> -> vector<2x1x8xf32>
    %cst_16 = arith.constant dense<0.000000e+00> : vector<2x1x8xf32>
    %24 = tpu.matmul %11, %0, %cst_16 {dimension_numbers = #tpu.dot_dimension_numbers<[2], [2], [1], [1], [0, 0, 0, 1, 1, 1], [0], [0]>} : vector<2x1x32xf32>, vector<2x8x32xf32>, vector<2x1x8xf32> -> vector<2x1x8xf32>
    "tpu.trace_stop"() : () -> ()
    %25 = vector.broadcast %18 : vector<2x8x1xf32> to vector<2x8x8xf32>
    %26 = vector.broadcast %24 : vector<2x1x8xf32> to vector<2x8x8xf32>
    %27 = arith.addf %25, %26 : vector<2x8x8xf32>
    %28 = vector.broadcast %7 : f32 to vector<2x8x8xf32>
    %29 = arith.addf %27, %28 : vector<2x8x8xf32>
    %30 = math.tanh %29 : vector<2x8x8xf32>
    %31 = vector.broadcast %22 : vector<2x8x1xf32> to vector<2x8x8xf32>
    %32 = vector.broadcast %23 : vector<2x1x8xf32> to vector<2x8x8xf32>
    %33 = arith.addf %31, %32 : vector<2x8x8xf32>
    %34 = vector.broadcast %7 : f32 to vector<2x8x8xf32>
    %35 = arith.addf %33, %34 : vector<2x8x8xf32>
    %36 = math.tanh %35 : vector<2x8x8xf32>
    %cst_17 = arith.constant 1.000000e+00 : f32
    %37 = vector.broadcast %cst_17 : f32 to vector<2x8x8xf32>
    %38 = arith.cmpf oeq, %1, %37 : vector<2x8x8xf32>
    %cst_18 = arith.constant 0.000000e+00 : f32
    %39 = vector.broadcast %cst_18 : f32 to vector<2x8x8xf32>
    %40 = arith.select %38, %30, %39 : vector<2x8x8xi1>, vector<2x8x8xf32>
    %cst_19 = arith.constant 1.000000e+00 : f32
    %41 = vector.broadcast %cst_19 : f32 to vector<2x8x8xf32>
    %42 = arith.cmpf oeq, %2, %41 : vector<2x8x8xf32>
    %cst_20 = arith.constant 0.000000e+00 : f32
    %43 = vector.broadcast %cst_20 : f32 to vector<2x8x8xf32>
    %44 = arith.select %42, %36, %43 : vector<2x8x8xi1>, vector<2x8x8xf32>
    %45 = arith.addf %40, %44 : vector<2x8x8xf32>
    %cst_21 = arith.constant 5.000000e-01 : f32
    %46 = vector.broadcast %cst_21 : f32 to vector<2x8x8xf32>
    %47 = arith.mulf %46, %45 : vector<2x8x8xf32>
    %cst_22 = arith.constant -9.000000e+15 : f32
    %48 = vector.broadcast %cst_22 : f32 to vector<2x8x8xf32>
    %49 = arith.select %14, %48, %47 : vector<2x8x8xi1>, vector<2x8x8xf32>
    %cst_23 = arith.constant dense<0xFF800000> : vector<2x8xf32>
    %50 = vector.multi_reduction <maximumf>, %49, %cst_23 [2] : vector<2x8x8xf32> to vector<2x8xf32>
    %51 = vector.shape_cast %50 : vector<2x8xf32> to vector<2x8x1xf32>
    %52 = vector.broadcast %51 : vector<2x8x1xf32> to vector<2x8x8xf32>
    %53 = arith.subf %49, %52 : vector<2x8x8xf32>
    %54 = math.exp %53 : vector<2x8x8xf32>
    %cst_24 = arith.constant dense<0.000000e+00> : vector<2x8xf32>
    %55 = vector.multi_reduction <add>, %54, %cst_24 [2] : vector<2x8x8xf32> to vector<2x8xf32>
    %56 = vector.shape_cast %55 : vector<2x8xf32> to vector<2x8x1xf32>
    %57 = vector.broadcast %56 : vector<2x8x1xf32> to vector<2x8x8xf32>
    %58 = arith.divf %54, %57 : vector<2x8x8xf32>
    "tpu.trace_start"() <{level = 10 : i32, message = "bij,bjd->bid"}> : () -> ()
    %cst_25 = arith.constant dense<0.000000e+00> : vector<2x8x32xf32>
    %59 = tpu.matmul %58, %0, %cst_25 {dimension_numbers = #tpu.dot_dimension_numbers<[2], [1], [1], [2], [0, 0, 0, 1, 1, 2], [0], [0]>} : vector<2x8x8xf32>, vector<2x8x32xf32>, vector<2x8x32xf32> -> vector<2x8x32xf32>
    "tpu.trace_stop"() : () -> ()
    %c0_26 = arith.constant 0 : index
    %c0_27 = arith.constant 0 : index
    %c0_28 = arith.constant 0 : index
    %60 = vector.load %arg4[%c0_26, %c0_27, %c0_28] : memref<2x8x1xi32, #tpu.memory_space<vmem>>, vector<2x8x1xi32>
    %61 = tpu.iota {dimensions = array<i32: 2>} : vector<2x8x8xi32>
    %62 = vector.broadcast %60 : vector<2x8x1xi32> to vector<2x8x8xi32>
    %63 = arith.cmpi eq, %62, %61 : vector<2x8x8xi32>
    %64 = arith.extui %63 : vector<2x8x8xi1> to vector<2x8x8xi32>
    %65 = arith.sitofp %64 : vector<2x8x8xi32> to vector<2x8x8xf32>
    "tpu.trace_start"() <{level = 10 : i32, message = "blu,bud->bld"}> : () -> ()
    %cst_29 = arith.constant dense<0.000000e+00> : vector<2x8x32xf32>
    %66 = tpu.matmul %65, %59, %cst_29 {dimension_numbers = #tpu.dot_dimension_numbers<[2], [1], [1], [2], [0, 0, 0, 1, 1, 2], [0], [0]>} : vector<2x8x8xf32>, vector<2x8x32xf32>, vector<2x8x32xf32> -> vector<2x8x32xf32>
    "tpu.trace_stop"() : () -> ()
    %c0_30 = arith.constant 0 : index
    %c0_31 = arith.constant 0 : index
    %c0_32 = arith.constant 0 : index
    %67 = vector.load %arg5[%c0_30, %c0_31, %c0_32] : memref<2x8x32xf32, #tpu.memory_space<vmem>>, vector<2x8x32xf32>
    %cst_33 = arith.constant 0.000000e+00 : f32
    %68 = vector.broadcast %cst_33 : f32 to vector<2x10x32xf32>
    %c0_34 = arith.constant 0 : index
    %c0_35 = arith.constant 0 : index
    %c0_36 = arith.constant 0 : index
    %69 = vector.load %arg24[%c0_34, %c0_35, %c0_36] : memref<2x10x32xf32, #tpu.memory_space<vmem>>, vector<2x10x32xf32>
    tpu.vector_store %arg24[%c0_34, %c0_35, %c0_36], %68 {strides = array<i32>} : memref<2x10x32xf32, #tpu.memory_space<vmem>>, vector<2x10x32xf32>,
    %c0_37 = arith.constant 0 : index
    %c1 = arith.constant 1 : index
    %c0_38 = arith.constant 0 : index
    %70 = vector.load %arg24[%c0_37, %c1, %c0_38] : memref<2x10x32xf32, #tpu.memory_space<vmem>>, vector<2x8x32xf32>
    tpu.vector_store %arg24[%c0_37, %c1, %c0_38], %67 {strides = array<i32>} : memref<2x10x32xf32, #tpu.memory_space<vmem>>, vector<2x8x32xf32>,
    %cst_39 = arith.constant 0.000000e+00 : f32
    %71 = vector.broadcast %cst_39 : f32 to vector<2x8x32xf32>
    %cst_40 = arith.constant 0.000000e+00 : f32
    %72 = vector.broadcast %cst_40 : f32 to vector<2x8x32xf32>
    %cst_41 = arith.constant 0.000000e+00 : f32
    %73 = vector.broadcast %cst_41 : f32 to vector<2x8x32xf32>
    %c0_42 = arith.constant 0 : index
    %c0_43 = arith.constant 0 : index
    %c0_44 = arith.constant 0 : index
    %74 = vector.load %arg24[%c0_42, %c0_43, %c0_44] : memref<2x10x32xf32, #tpu.memory_space<vmem>>, vector<2x8x32xf32>
    %c0_45 = arith.constant 0 : index
    %c0_46 = arith.constant 0 : index
    %75 = vector.load %arg10[%c0_45, %c0_46] : memref<3x32xf32, #tpu.memory_space<vmem>>, vector<1x32xf32>
    %76 = vector.shape_cast %75 : vector<1x32xf32> to vector<1x1x32xf32>
    %77 = vector.broadcast %76 : vector<1x1x32xf32> to vector<2x8x32xf32>
    %78 = arith.mulf %74, %77 : vector<2x8x32xf32>
    %79 = arith.addf %71, %78 : vector<2x8x32xf32>
    %c0_47 = arith.constant 0 : index
    %c0_48 = arith.constant 0 : index
    %80 = vector.load %arg12[%c0_47, %c0_48] : memref<3x32xf32, #tpu.memory_space<vmem>>, vector<1x32xf32>
    %81 = vector.shape_cast %80 : vector<1x32xf32> to vector<1x1x32xf32>
    %82 = vector.broadcast %81 : vector<1x1x32xf32> to vector<2x8x32xf32>
    %83 = arith.mulf %74, %82 : vector<2x8x32xf32>
    %84 = arith.addf %72, %83 : vector<2x8x32xf32>
    %c0_49 = arith.constant 0 : index
    %c0_50 = arith.constant 0 : index
    %85 = vector.load %arg14[%c0_49, %c0_50] : memref<3x32xf32, #tpu.memory_space<vmem>>, vector<1x32xf32>
    %86 = vector.shape_cast %85 : vector<1x32xf32> to vector<1x1x32xf32>
    %87 = vector.broadcast %86 : vector<1x1x32xf32> to vector<2x8x32xf32>
    %88 = arith.mulf %74, %87 : vector<2x8x32xf32>
    %89 = arith.addf %73, %88 : vector<2x8x32xf32>
    %c0_51 = arith.constant 0 : index
    %c1_52 = arith.constant 1 : index
    %c0_53 = arith.constant 0 : index
    %90 = vector.load %arg24[%c0_51, %c1_52, %c0_53] : memref<2x10x32xf32, #tpu.memory_space<vmem>>, vector<2x8x32xf32>
    %c1_54 = arith.constant 1 : index
    %c0_55 = arith.constant 0 : index
    %91 = vector.load %arg10[%c1_54, %c0_55] : memref<3x32xf32, #tpu.memory_space<vmem>>, vector<1x32xf32>
    %92 = vector.shape_cast %91 : vector<1x32xf32> to vector<1x1x32xf32>
    %93 = vector.broadcast %92 : vector<1x1x32xf32> to vector<2x8x32xf32>
    %94 = arith.mulf %90, %93 : vector<2x8x32xf32>
    %95 = arith.addf %79, %94 : vector<2x8x32xf32>
    %c1_56 = arith.constant 1 : index
    %c0_57 = arith.constant 0 : index
    %96 = vector.load %arg12[%c1_56, %c0_57] : memref<3x32xf32, #tpu.memory_space<vmem>>, vector<1x32xf32>
    %97 = vector.shape_cast %96 : vector<1x32xf32> to vector<1x1x32xf32>
    %98 = vector.broadcast %97 : vector<1x1x32xf32> to vector<2x8x32xf32>
    %99 = arith.mulf %90, %98 : vector<2x8x32xf32>
    %100 = arith.addf %84, %99 : vector<2x8x32xf32>
    %c1_58 = arith.constant 1 : index
    %c0_59 = arith.constant 0 : index
    %101 = vector.load %arg14[%c1_58, %c0_59] : memref<3x32xf32, #tpu.memory_space<vmem>>, vector<1x32xf32>
    %102 = vector.shape_cast %101 : vector<1x32xf32> to vector<1x1x32xf32>
    %103 = vector.broadcast %102 : vector<1x1x32xf32> to vector<2x8x32xf32>
    %104 = arith.mulf %90, %103 : vector<2x8x32xf32>
    %105 = arith.addf %89, %104 : vector<2x8x32xf32>
    %c0_60 = arith.constant 0 : index
    %c2 = arith.constant 2 : index
    %c0_61 = arith.constant 0 : index
    %106 = vector.load %arg24[%c0_60, %c2, %c0_61] : memref<2x10x32xf32, #tpu.memory_space<vmem>>, vector<2x8x32xf32>
    %c2_62 = arith.constant 2 : index
    %c0_63 = arith.constant 0 : index
    %107 = vector.load %arg10[%c2_62, %c0_63] : memref<3x32xf32, #tpu.memory_space<vmem>>, vector<1x32xf32>
    %108 = vector.shape_cast %107 : vector<1x32xf32> to vector<1x1x32xf32>
    %109 = vector.broadcast %108 : vector<1x1x32xf32> to vector<2x8x32xf32>
    %110 = arith.mulf %106, %109 : vector<2x8x32xf32>
    %111 = arith.addf %95, %110 : vector<2x8x32xf32>
    %c2_64 = arith.constant 2 : index
    %c0_65 = arith.constant 0 : index
    %112 = vector.load %arg12[%c2_64, %c0_65] : memref<3x32xf32, #tpu.memory_space<vmem>>, vector<1x32xf32>
    %113 = vector.shape_cast %112 : vector<1x32xf32> to vector<1x1x32xf32>
    %114 = vector.broadcast %113 : vector<1x1x32xf32> to vector<2x8x32xf32>
    %115 = arith.mulf %106, %114 : vector<2x8x32xf32>
    %116 = arith.addf %100, %115 : vector<2x8x32xf32>
    %c2_66 = arith.constant 2 : index
    %c0_67 = arith.constant 0 : index
    %117 = vector.load %arg14[%c2_66, %c0_67] : memref<3x32xf32, #tpu.memory_space<vmem>>, vector<1x32xf32>
    %118 = vector.shape_cast %117 : vector<1x32xf32> to vector<1x1x32xf32>
    %119 = vector.broadcast %118 : vector<1x1x32xf32> to vector<2x8x32xf32>
    %120 = arith.mulf %106, %119 : vector<2x8x32xf32>
    %121 = arith.addf %105, %120 : vector<2x8x32xf32>
    %c0_68 = arith.constant 0 : index
    %c0_69 = arith.constant 0 : index
    %122 = vector.load %arg11[%c0_68, %c0_69] : memref<1x32xf32, #tpu.memory_space<vmem>>, vector<1x32xf32>
    %123 = vector.shape_cast %122 : vector<1x32xf32> to vector<1x1x32xf32>
    %124 = vector.broadcast %123 : vector<1x1x32xf32> to vector<2x8x32xf32>
    %125 = arith.addf %111, %124 : vector<2x8x32xf32>
    %cst_70 = arith.constant 0.000000e+00 : f32
    %126 = vector.broadcast %cst_70 : f32 to vector<2x8x32xf32>
    %127 = arith.cmpf oge, %125, %126 : vector<2x8x32xf32>
    %cst_71 = arith.constant 2.000000e-01 : f32
    %128 = vector.broadcast %cst_71 : f32 to vector<2x8x32xf32>
    %129 = arith.mulf %128, %125 : vector<2x8x32xf32>
    %130 = arith.select %127, %125, %129 : vector<2x8x32xi1>, vector<2x8x32xf32>
    %c0_72 = arith.constant 0 : index
    %c0_73 = arith.constant 0 : index
    %131 = vector.load %arg13[%c0_72, %c0_73] : memref<1x32xf32, #tpu.memory_space<vmem>>, vector<1x32xf32>
    %132 = vector.shape_cast %131 : vector<1x32xf32> to vector<1x1x32xf32>
    %133 = vector.broadcast %132 : vector<1x1x32xf32> to vector<2x8x32xf32>
    %134 = arith.addf %116, %133 : vector<2x8x32xf32>
    %cst_74 = arith.constant 0.000000e+00 : f32
    %135 = vector.broadcast %cst_74 : f32 to vector<2x8x32xf32>
    %136 = arith.cmpf oge, %134, %135 : vector<2x8x32xf32>
    %cst_75 = arith.constant 2.000000e-01 : f32
    %137 = vector.broadcast %cst_75 : f32 to vector<2x8x32xf32>
    %138 = arith.mulf %137, %134 : vector<2x8x32xf32>
    %139 = arith.select %136, %134, %138 : vector<2x8x32xi1>, vector<2x8x32xf32>
    %c0_76 = arith.constant 0 : index
    %c0_77 = arith.constant 0 : index
    %140 = vector.load %arg15[%c0_76, %c0_77] : memref<1x32xf32, #tpu.memory_space<vmem>>, vector<1x32xf32>
    %141 = vector.shape_cast %140 : vector<1x32xf32> to vector<1x1x32xf32>
    %142 = vector.broadcast %141 : vector<1x1x32xf32> to vector<2x8x32xf32>
    %143 = arith.addf %121, %142 : vector<2x8x32xf32>
    %cst_78 = arith.constant 0.000000e+00 : f32
    %144 = vector.broadcast %cst_78 : f32 to vector<2x8x32xf32>
    %145 = arith.cmpf oge, %143, %144 : vector<2x8x32xf32>
    %cst_79 = arith.constant 2.000000e-01 : f32
    %146 = vector.broadcast %cst_79 : f32 to vector<2x8x32xf32>
    %147 = arith.mulf %146, %143 : vector<2x8x32xf32>
    %148 = arith.select %145, %143, %147 : vector<2x8x32xi1>, vector<2x8x32xf32>
    "tpu.trace_start"() <{level = 10 : i32, message = "bqd,bkd->bqk"}> : () -> ()
    %cst_80 = arith.constant dense<0.000000e+00> : vector<2x8x8xf32>
    %149 = tpu.matmul %130, %139, %cst_80 {dimension_numbers = #tpu.dot_dimension_numbers<[2], [2], [1], [1], [0, 0, 0, 1, 1, 1], [0], [0]>} : vector<2x8x32xf32>, vector<2x8x32xf32>, vector<2x8x8xf32> -> vector<2x8x8xf32>
    "tpu.trace_stop"() : () -> ()
    %cst_81 = arith.constant 0.353553385 : f32
    %150 = vector.broadcast %cst_81 : f32 to vector<2x8x8xf32>
    %151 = arith.mulf %149, %150 : vector<2x8x8xf32>
    %c0_82 = arith.constant 0 : index
    %c0_83 = arith.constant 0 : index
    %c0_84 = arith.constant 0 : index
    %152 = vector.load %arg6[%c0_82, %c0_83, %c0_84] : memref<2x8x8xf32, #tpu.memory_space<vmem>>, vector<2x8x8xf32>
    %cst_85 = arith.constant 0.000000e+00 : f32
    %153 = vector.broadcast %cst_85 : f32 to vector<2x8x8xf32>
    %154 = arith.cmpf oeq, %152, %153 : vector<2x8x8xf32>
    %cst_86 = arith.constant -9.000000e+15 : f32
    %155 = vector.broadcast %cst_86 : f32 to vector<2x8x8xf32>
    %156 = arith.select %154, %155, %151 : vector<2x8x8xi1>, vector<2x8x8xf32>
    %cst_87 = arith.constant dense<0xFF800000> : vector<2x8xf32>
    %157 = vector.multi_reduction <maximumf>, %156, %cst_87 [2] : vector<2x8x8xf32> to vector<2x8xf32>
    %158 = vector.shape_cast %157 : vector<2x8xf32> to vector<2x8x1xf32>
    %159 = vector.broadcast %158 : vector<2x8x1xf32> to vector<2x8x8xf32>
    %160 = arith.subf %156, %159 : vector<2x8x8xf32>
    %161 = math.exp %160 : vector<2x8x8xf32>
    %cst_88 = arith.constant dense<0.000000e+00> : vector<2x8xf32>
    %162 = vector.multi_reduction <add>, %161, %cst_88 [2] : vector<2x8x8xf32> to vector<2x8xf32>
    %163 = vector.shape_cast %162 : vector<2x8xf32> to vector<2x8x1xf32>
    %164 = vector.broadcast %163 : vector<2x8x1xf32> to vector<2x8x8xf32>
    %165 = arith.divf %161, %164 : vector<2x8x8xf32>
    "tpu.trace_start"() <{level = 10 : i32, message = "bqk,bkd->bqd"}> : () -> ()
    %cst_89 = arith.constant dense<0.000000e+00> : vector<2x8x32xf32>
    %166 = tpu.matmul %165, %148, %cst_89 {dimension_numbers = #tpu.dot_dimension_numbers<[2], [1], [1], [2], [0, 0, 0, 1, 1, 2], [0], [0]>} : vector<2x8x8xf32>, vector<2x8x32xf32>, vector<2x8x32xf32> -> vector<2x8x32xf32>
    "tpu.trace_stop"() : () -> ()
    %167 = arith.addf %66, %166 : vector<2x8x32xf32>
    %c0_90 = arith.constant 0 : index
    %c0_91 = arith.constant 0 : index
    %c0_92 = arith.constant 0 : index
    %168 = vector.load %arg7[%c0_90, %c0_91, %c0_92] : memref<2x8x1xf32, #tpu.memory_space<vmem>>, vector<2x8x1xf32>
    %cst_93 = arith.constant dense<0.000000e+00> : vector<2x1xf32>
    %169 = vector.multi_reduction <add>, %168, %cst_93 [1] : vector<2x8x1xf32> to vector<2x1xf32>
    %170 = vector.shape_cast %169 : vector<2x1xf32> to vector<2x1x1xf32>
    %171 = arith.fptosi %170 : vector<2x1x1xf32> to vector<2x1x1xi32>
    %c1_i32 = arith.constant 1 : i32
    %172 = vector.broadcast %c1_i32 : i32 to vector<2x1x1xi32>
    %173 = arith.subi %171, %172 : vector<2x1x1xi32>
    %174 = tpu.iota {dimensions = array<i32: 1>} : vector<2x8x1xi32>
    %175 = vector.broadcast %173 : vector<2x1x1xi32> to vector<2x8x1xi32>
    %176 = arith.cmpi eq, %174, %175 : vector<2x8x1xi32>
    %177 = arith.extui %176 : vector<2x8x1xi1> to vector<2x8x1xi32>
    %178 = arith.sitofp %177 : vector<2x8x1xi32> to vector<2x8x1xf32>
    %179 = vector.broadcast %178 : vector<2x8x1xf32> to vector<2x8x32xf32>
    %180 = arith.mulf %167, %179 : vector<2x8x32xf32>
    %cst_94 = arith.constant dense<0.000000e+00> : vector<2x32xf32>
    %181 = vector.multi_reduction <add>, %180, %cst_94 [1] : vector<2x8x32xf32> to vector<2x32xf32>
    %182 = vector.shape_cast %181 : vector<2x32xf32> to vector<2x1x32xf32>
    %183 = vector.broadcast %168 : vector<2x8x1xf32> to vector<2x8x32xf32>
    %184 = arith.mulf %167, %183 : vector<2x8x32xf32>
    %cst_95 = arith.constant dense<0.000000e+00> : vector<2x32xf32>
    %185 = vector.multi_reduction <add>, %184, %cst_95 [1] : vector<2x8x32xf32> to vector<2x32xf32>
    %186 = vector.shape_cast %185 : vector<2x32xf32> to vector<2x1x32xf32>
    %187 = vector.broadcast %170 : vector<2x1x1xf32> to vector<2x1x32xf32>
    %188 = arith.divf %186, %187 : vector<2x1x32xf32>
    %c0_96 = arith.constant 0 : index
    %c0_97 = arith.constant 0 : index
    %189 = vector.load %arg16[%c0_96, %c0_97] : memref<32x32xf32, #tpu.memory_space<vmem>>, vector<32x32xf32>
    %190 = vector.shape_cast %189 : vector<32x32xf32> to vector<1x32x32xf32>
    %191 = vector.shape_cast %190 : vector<1x32x32xf32> to vector<1x32x32xf32>
    %192 = vector.broadcast %191 : vector<1x32x32xf32> to vector<2x32x32xf32>
    %c0_98 = arith.constant 0 : index
    %c0_99 = arith.constant 0 : index
    %193 = vector.load %arg18[%c0_98, %c0_99] : memref<32x32xf32, #tpu.memory_space<vmem>>, vector<32x32xf32>
    %194 = vector.shape_cast %193 : vector<32x32xf32> to vector<1x32x32xf32>
    %195 = vector.shape_cast %194 : vector<1x32x32xf32> to vector<1x32x32xf32>
    %196 = vector.broadcast %195 : vector<1x32x32xf32> to vector<2x32x32xf32>
    %c0_100 = arith.constant 0 : index
    %c0_101 = arith.constant 0 : index
    %197 = vector.load %arg19[%c0_100, %c0_101] : memref<32x32xf32, #tpu.memory_space<vmem>>, vector<32x32xf32>
    %198 = vector.shape_cast %197 : vector<32x32xf32> to vector<1x32x32xf32>
    %199 = vector.shape_cast %198 : vector<1x32x32xf32> to vector<1x32x32xf32>
    %200 = vector.broadcast %199 : vector<1x32x32xf32> to vector<2x32x32xf32>
    %c0_102 = arith.constant 0 : index
    %c0_103 = arith.constant 0 : index
    %201 = vector.load %arg20[%c0_102, %c0_103] : memref<32x32xf32, #tpu.memory_space<vmem>>, vector<32x32xf32>
    %202 = vector.shape_cast %201 : vector<32x32xf32> to vector<1x32x32xf32>
    %203 = vector.shape_cast %202 : vector<1x32x32xf32> to vector<1x32x32xf32>
    %204 = vector.broadcast %203 : vector<1x32x32xf32> to vector<2x32x32xf32>
    "tpu.trace_start"() <{level = 10 : i32, message = "bod,bde->boe"}> : () -> ()
    %cst_104 = arith.constant dense<0.000000e+00> : vector<2x1x32xf32>
    %205 = tpu.matmul %188, %196, %cst_104 {dimension_numbers = #tpu.dot_dimension_numbers<[2], [1], [1], [2], [0, 0, 0, 1, 1, 2], [0], [0]>} : vector<2x1x32xf32>, vector<2x32x32xf32>, vector<2x1x32xf32> -> vector<2x1x32xf32>
    %cst_105 = arith.constant dense<0.000000e+00> : vector<2x1x32xf32>
    %206 = tpu.matmul %182, %200, %cst_105 {dimension_numbers = #tpu.dot_dimension_numbers<[2], [1], [1], [2], [0, 0, 0, 1, 1, 2], [0], [0]>} : vector<2x1x32xf32>, vector<2x32x32xf32>, vector<2x1x32xf32> -> vector<2x1x32xf32>
    "tpu.trace_stop"() : () -> ()
    %207 = arith.addf %205, %206 : vector<2x1x32xf32>
    %208 = arith.cmpf ogt, %188, %182 : vector<2x1x32xf32>
    %209 = arith.select %208, %188, %182 : vector<2x1x32xi1>, vector<2x1x32xf32>
    "tpu.trace_start"() <{level = 10 : i32, message = "bod,bde->boe"}> : () -> ()
    %cst_106 = arith.constant dense<0.000000e+00> : vector<2x1x32xf32>
    %210 = tpu.matmul %209, %204, %cst_106 {dimension_numbers = #tpu.dot_dimension_numbers<[2], [1], [1], [2], [0, 0, 0, 1, 1, 2], [0], [0]>} : vector<2x1x32xf32>, vector<2x32x32xf32>, vector<2x1x32xf32> -> vector<2x1x32xf32>
    "tpu.trace_stop"() : () -> ()
    %211 = arith.addf %207, %210 : vector<2x1x32xf32>
    "tpu.trace_start"() <{level = 10 : i32, message = "bld,bde->ble"}> : () -> ()
    %cst_107 = arith.constant dense<0.000000e+00> : vector<2x8x32xf32>
    %212 = tpu.matmul %167, %192, %cst_107 {dimension_numbers = #tpu.dot_dimension_numbers<[2], [1], [1], [2], [0, 0, 0, 1, 1, 2], [0], [0]>} : vector<2x8x32xf32>, vector<2x32x32xf32>, vector<2x8x32xf32> -> vector<2x8x32xf32>
    "tpu.trace_stop"() : () -> ()
    %c0_108 = arith.constant 0 : index
    %c0_109 = arith.constant 0 : index
    %213 = vector.load %arg17[%c0_108, %c0_109] : memref<1x32xf32, #tpu.memory_space<vmem>>, vector<1x32xf32>
    %214 = vector.shape_cast %213 : vector<1x32xf32> to vector<1x1x32xf32>
    %215 = vector.broadcast %214 : vector<1x1x32xf32> to vector<2x8x32xf32>
    %216 = arith.addf %212, %215 : vector<2x8x32xf32>
    %217 = vector.broadcast %211 : vector<2x1x32xf32> to vector<2x8x32xf32>
    %218 = arith.addf %216, %217 : vector<2x8x32xf32>
    %cst_110 = arith.constant 0.000000e+00 : f32
    %219 = vector.broadcast %cst_110 : f32 to vector<2x8x32xf32>
    %220 = arith.cmpf oge, %218, %219 : vector<2x8x32xf32>
    %cst_111 = arith.constant 2.000000e-01 : f32
    %221 = vector.broadcast %cst_111 : f32 to vector<2x8x32xf32>
    %222 = arith.mulf %221, %218 : vector<2x8x32xf32>
    %223 = arith.select %220, %218, %222 : vector<2x8x32xi1>, vector<2x8x32xf32>
    %c0_112 = arith.constant 0 : index
    %c0_113 = arith.constant 0 : index
    %224 = vector.load %arg21[%c0_112, %c0_113] : memref<1x32xf32, #tpu.memory_space<vmem>>, vector<1x32xf32>
    %225 = vector.shape_cast %224 : vector<1x32xf32> to vector<1x1x32xf32>
    %226 = vector.broadcast %225 : vector<1x1x32xf32> to vector<2x8x32xf32>
    %227 = arith.mulf %223, %226 : vector<2x8x32xf32>
    %cst_114 = arith.constant dense<0.000000e+00> : vector<2x8xf32>
    %228 = vector.multi_reduction <add>, %227, %cst_114 [2] : vector<2x8x32xf32> to vector<2x8xf32>
    %229 = vector.shape_cast %228 : vector<2x8xf32> to vector<2x8x1xf32>
    %c0_115 = arith.constant 0 : index
    %c0_116 = arith.constant 0 : index
    %230 = vector.load %arg22[%c0_115, %c0_116] : memref<1x32xf32, #tpu.memory_space<vmem>>, vector<1x32xf32>
    %231 = vector.shape_cast %230 : vector<1x32xf32> to vector<1x1x32xf32>
    %232 = vector.broadcast %229 : vector<2x8x1xf32> to vector<2x8x32xf32>
    %233 = vector.broadcast %231 : vector<1x1x32xf32> to vector<2x8x32xf32>
    %234 = arith.addf %232, %233 : vector<2x8x32xf32>
    %235 = vector.broadcast %168 : vector<2x8x1xf32> to vector<2x8x32xf32>
    %236 = arith.mulf %234, %235 : vector<2x8x32xf32>
    %237 = arith.mulf %236, %66 : vector<2x8x32xf32>
    %cst_117 = arith.constant dense<0.000000e+00> : vector<2x32xf32>
    %238 = vector.multi_reduction <add>, %237, %cst_117 [1] : vector<2x8x32xf32> to vector<2x32xf32>
    %c0_118 = arith.constant 0 : index
    %c0_119 = arith.constant 0 : index
    %239 = vector.load %arg23[%c0_118, %c0_119] : memref<2x32xf32, #tpu.memory_space<vmem>>, vector<2x32xf32>
    tpu.vector_store %arg23[%c0_118, %c0_119], %238 {strides = array<i32>} : memref<2x32xf32, #tpu.memory_space<vmem>>, vector<2x32xf32>,
    return
  }
  func.func @transform_0(%arg0: i32) -> (i32, i32, i32) {
    %c0_i32 = arith.constant 0 : i32
    %c0_i32_0 = arith.constant 0 : i32
    %c0_i32_1 = arith.constant 0 : i32
    return %arg0, %c0_i32, %c0_i32_0 : i32, i32, i32
  }
  func.func @transform_1(%arg0: i32) -> (i32, i32, i32) {
    %c0_i32 = arith.constant 0 : i32
    %c0_i32_0 = arith.constant 0 : i32
    %c0_i32_1 = arith.constant 0 : i32
    return %arg0, %c0_i32, %c0_i32_0 : i32, i32, i32
  }
  func.func @transform_2(%arg0: i32) -> (i32, i32, i32) {
    %c0_i32 = arith.constant 0 : i32
    %c0_i32_0 = arith.constant 0 : i32
    %c0_i32_1 = arith.constant 0 : i32
    return %arg0, %c0_i32, %c0_i32_0 : i32, i32, i32
  }
  func.func @transform_3(%arg0: i32) -> (i32, i32, i32) {
    %c0_i32 = arith.constant 0 : i32
    %c0_i32_0 = arith.constant 0 : i32
    %c0_i32_1 = arith.constant 0 : i32
    return %arg0, %c0_i32, %c0_i32_0 : i32, i32, i32
  }
  func.func @transform_4(%arg0: i32) -> (i32, i32, i32) {
    %c0_i32 = arith.constant 0 : i32
    %c0_i32_0 = arith.constant 0 : i32
    %c0_i32_1 = arith.constant 0 : i32
    return %arg0, %c0_i32, %c0_i32_0 : i32, i32, i32
  }
  func.func @transform_5(%arg0: i32) -> (i32, i32, i32) {
    %c0_i32 = arith.constant 0 : i32
    %c0_i32_0 = arith.constant 0 : i32
    %c0_i32_1 = arith.constant 0 : i32
    return %arg0, %c0_i32, %c0_i32_0 : i32, i32, i32
  }
  func.func @transform_6(%arg0: i32) -> (i32, i32, i32) {
    %c0_i32 = arith.constant 0 : i32
    %c0_i32_0 = arith.constant 0 : i32
    %c0_i32_1 = arith.constant 0 : i32
    return %arg0, %c0_i32, %c0_i32_0 : i32, i32, i32
  }
  func.func @transform_7(%arg0: i32) -> (i32, i32) {
    %c0_i32 = arith.constant 0 : i32
    %c0_i32_0 = arith.constant 0 : i32
    %c0_i32_1 = arith.constant 0 : i32
    return %c0_i32, %c0_i32_0 : i32, i32
  }
  func.func @transform_8(%arg0: i32) -> (i32, i32) {
    %c0_i32 = arith.constant 0 : i32
    %c0_i32_0 = arith.constant 0 : i32
    %c0_i32_1 = arith.constant 0 : i32
    return %c0_i32, %c0_i32_0 : i32, i32
  }
  func.func @transform_9(%arg0: i32) -> (i32, i32) {
    %c0_i32 = arith.constant 0 : i32
    %c0_i32_0 = arith.constant 0 : i32
    %c0_i32_1 = arith.constant 0 : i32
    return %c0_i32, %c0_i32_0 : i32, i32
  }
  func.func @transform_10(%arg0: i32) -> (i32, i32) {
    %c0_i32 = arith.constant 0 : i32
    %c0_i32_0 = arith.constant 0 : i32
    %c0_i32_1 = arith.constant 0 : i32
    return %c0_i32, %c0_i32_0 : i32, i32
  }
  func.func @transform_11(%arg0: i32) -> (i32, i32) {
    %c0_i32 = arith.constant 0 : i32
    %c0_i32_0 = arith.constant 0 : i32
    %c0_i32_1 = arith.constant 0 : i32
    return %c0_i32, %c0_i32_0 : i32, i32
  }
  func.func @transform_12(%arg0: i32) -> (i32, i32) {
    %c0_i32 = arith.constant 0 : i32
    %c0_i32_0 = arith.constant 0 : i32
    %c0_i32_1 = arith.constant 0 : i32
    return %c0_i32, %c0_i32_0 : i32, i32
  }
  func.func @transform_13(%arg0: i32) -> (i32, i32) {
    %c0_i32 = arith.constant 0 : i32
    %c0_i32_0 = arith.constant 0 : i32
    %c0_i32_1 = arith.constant 0 : i32
    return %c0_i32, %c0_i32_0 : i32, i32
  }
  func.func @transform_14(%arg0: i32) -> (i32, i32) {
    %c0_i32 = arith.constant 0 : i32
    %c0_i32_0 = arith.constant 0 : i32
    %c0_i32_1 = arith.constant 0 : i32
    return %c0_i32, %c0_i32_0 : i32, i32
  }
  func.func @transform_15(%arg0: i32) -> (i32, i32) {
    %c0_i32 = arith.constant 0 : i32
    %c0_i32_0 = arith.constant 0 : i32
    %c0_i32_1 = arith.constant 0 : i32
    return %c0_i32, %c0_i32_0 : i32, i32
  }
  func.func @transform_16(%arg0: i32) -> (i32, i32) {
    %c0_i32 = arith.constant 0 : i32
    %c0_i32_0 = arith.constant 0 : i32
    %c0_i32_1 = arith.constant 0 : i32
    return %c0_i32, %c0_i32_0 : i32, i32
  }
  func.func @transform_17(%arg0: i32) -> (i32, i32) {
    %c0_i32 = arith.constant 0 : i32
    %c0_i32_0 = arith.constant 0 : i32
    %c0_i32_1 = arith.constant 0 : i32
    return %c0_i32, %c0_i32_0 : i32, i32
  }
  func.func @transform_18(%arg0: i32) -> (i32, i32) {
    %c0_i32 = arith.constant 0 : i32
    %c0_i32_0 = arith.constant 0 : i32
    %c0_i32_1 = arith.constant 0 : i32
    return %c0_i32, %c0_i32_0 : i32, i32
  }
  func.func @transform_19(%arg0: i32) -> (i32, i32) {
    %c0_i32 = arith.constant 0 : i32
    %c0_i32_0 = arith.constant 0 : i32
    %c0_i32_1 = arith.constant 0 : i32
    return %c0_i32, %c0_i32_0 : i32, i32
  }
  func.func @transform_20(%arg0: i32) -> (i32, i32) {
    %c0_i32 = arith.constant 0 : i32
    %c0_i32_0 = arith.constant 0 : i32
    %c0_i32_1 = arith.constant 0 : i32
    return %c0_i32, %c0_i32_0 : i32, i32
  }
  func.func @transform_21(%arg0: i32) -> (i32, i32) {
    %c0_i32 = arith.constant 0 : i32
    %c0_i32_0 = arith.constant 0 : i32
    %c0_i32_1 = arith.constant 0 : i32
    return %c0_i32, %c0_i32_0 : i32, i32
  }
  func.func @transform_22(%arg0: i32) -> (i32, i32) {
    %c0_i32 = arith.constant 0 : i32
    %c0_i32_0 = arith.constant 0 : i32
    return %arg0, %c0_i32 : i32, i32
  }
}

</mosaic_0001>

<llo_original>
// kernel: model_forward.1
$region0: #{model_forward.1}
  #allocation0 [shape = 'u32[]', space=smem, size = 0x4, offset = 0x4, fixed_abs, tag = 'smem constant byte address 0x4 - core index']
  #allocation1 [shape = 'u32[144,128]{1,0:T(1,128)}', space=vmem, size = 0x12000, scoped, tag = 'internal scratch']
  #allocation2 [shape = 'f32[2,10,32]{2,1,0:T(8,128)}', space=vmem, size = 0x4000, scoped, tag = 'scratch operand']
  #allocation3 [shape = 'f32[1,1]{1,0:T(1,128)S(6)}', space=smem, size = 0x200, scoped, tag = 'scoped memory for model_forward.1']
  %s0 = inlined_call_operand.vmem [shape: f32[2,8,32], index: 0, kind: input, shape index: {}]
  %s1 = inlined_call_operand.vmem [shape: f32[2,8,8], index: 1, kind: input, shape index: {}]
  %s2 = inlined_call_operand.vmem [shape: f32[2,8,8], index: 2, kind: input, shape index: {}]
  %s3 = inlined_call_operand.vmem [shape: s32[2,8,1], index: 3, kind: input, shape index: {}]
  %s4 = inlined_call_operand.vmem [shape: f32[2,8,32], index: 4, kind: input, shape index: {}]
  %s5 = inlined_call_operand.vmem [shape: f32[2,8,8], index: 5, kind: input, shape index: {}]
  %s6 = inlined_call_operand.vmem [shape: f32[2,8,1], index: 6, kind: input, shape index: {}]
  %s7 = inlined_call_operand.vmem [shape: f32[1,64], index: 7, kind: input, shape index: {}]
  %s8 = inlined_call_operand.<no memory space> [shape: f32[1,1], index: 8, kind: input, shape index: {}]
  %s9 = inlined_call_operand.vmem [shape: f32[3,32], index: 9, kind: input, shape index: {}]
  %s10 = inlined_call_operand.vmem [shape: f32[1,32], index: 10, kind: input, shape index: {}]
  %s11 = inlined_call_operand.vmem [shape: f32[3,32], index: 11, kind: input, shape index: {}]
  %s12 = inlined_call_operand.vmem [shape: f32[1,32], index: 12, kind: input, shape index: {}]
  %s13 = inlined_call_operand.vmem [shape: f32[3,32], index: 13, kind: input, shape index: {}]
  %s14 = inlined_call_operand.vmem [shape: f32[1,32], index: 14, kind: input, shape index: {}]
  %s15 = inlined_call_operand.vmem [shape: f32[32,32], index: 15, kind: input, shape index: {}]
  %s16 = inlined_call_operand.vmem [shape: f32[1,32], index: 16, kind: input, shape index: {}]
  %s17 = inlined_call_operand.vmem [shape: f32[32,32], index: 17, kind: input, shape index: {}]
  %s18 = inlined_call_operand.vmem [shape: f32[32,32], index: 18, kind: input, shape index: {}]
  %s19 = inlined_call_operand.vmem [shape: f32[32,32], index: 19, kind: input, shape index: {}]
  %s20 = inlined_call_operand.vmem [shape: f32[1,32], index: 20, kind: input, shape index: {}]
  %s21 = inlined_call_operand.vmem [shape: f32[1,32], index: 21, kind: input, shape index: {}]
  %s22 = inlined_call_operand.hbm [shape: f32[2,32], index: 22, kind: output, shape index: {}]
  %s23 = sld [smem:[#allocation0]]
  $region98: #{model_forward.1} parent=0
    _
  %s25 = ssub.s32 1, %s23
  %s26 = scalar_select 0, %s25, %s23
  %27 = sst [smem:[#allocation3]] %s8
  $region1: #{model_forward.1} parent=0
    #allocation4 [shape = 'u8[1024]{0}', space=vmem, size = 0x400, scoped, tag = 'output window, operand 0, single buffered']
    #allocation5 [shape = 's32[1]{0}', space=sflag, size = 0x4, scoped, tag = 'scoped memory for model_forward.1']
    %28 = vsyncpa [#allocation5], 0
    // Predicated region
    $region2: #{model_forward.1} parent=1 // pred_check
      _
    $region3: #{model_forward.1} parent=1 // pred_check_branch
      %30 = sbr.rel (0) target = $region5
    $region4: #{model_forward.1} parent=1 // pred_region
      _
    $region5: #{model_forward.1} parent=1 // pred_fallthru
      _
    // Predicated region
    $region6: #{model_forward.1} parent=1 // pred_check
      _
    $region7: #{model_forward.1} parent=1 // pred_check_branch
      %32 = sbr.rel (0) target = $region9
    $region8: #{model_forward.1} parent=1 // pred_region
      _
    $region9: #{model_forward.1} parent=1 // pred_fallthru
      _
    // Predicated region
    $region10: #{model_forward.1} parent=1 // pred_check
      _
    $region11: #{model_forward.1} parent=1 // pred_check_branch
      %34 = sbr.rel (0) target = $region13
    $region12: #{model_forward.1} parent=1 // pred_region
      _
    $region13: #{model_forward.1} parent=1 // pred_fallthru
      _
    // Predicated region
    $region14: #{model_forward.1} parent=1 // pred_check
      _
    $region15: #{model_forward.1} parent=1 // pred_check_branch
      %36 = sbr.rel (0) target = $region17
    $region16: #{model_forward.1} parent=1 // pred_region
      _
    $region17: #{model_forward.1} parent=1 // pred_fallthru
      _
    // Predicated region
    $region18: #{model_forward.1} parent=1 // pred_check
      _
    $region19: #{model_forward.1} parent=1 // pred_check_branch
      %38 = sbr.rel (0) target = $region21
    $region20: #{model_forward.1} parent=1 // pred_region
      _
    $region21: #{model_forward.1} parent=1 // pred_fallthru
      _
    // Predicated region
    $region22: #{model_forward.1} parent=1 // pred_check
      _
    $region23: #{model_forward.1} parent=1 // pred_check_branch
      %40 = sbr.rel (0) target = $region25
    $region24: #{model_forward.1} parent=1 // pred_region
      _
    $region25: #{model_forward.1} parent=1 // pred_fallthru
      _
    // Predicated region
    $region26: #{model_forward.1} parent=1 // pred_check
      _
    $region27: #{model_forward.1} parent=1 // pred_check_branch
      %42 = sbr.rel (0) target = $region29
    $region28: #{model_forward.1} parent=1 // pred_region
      _
    $region29: #{model_forward.1} parent=1 // pred_fallthru
      _
    // Predicated region
    $region30: #{model_forward.1} parent=1 // pred_check
      _
    $region31: #{model_forward.1} parent=1 // pred_check_branch
      %44 = sbr.rel (0) target = $region33
    $region32: #{model_forward.1} parent=1 // pred_region
      _
    $region33: #{model_forward.1} parent=1 // pred_fallthru
      _
    // Predicated region
    $region34: #{model_forward.1} parent=1 // pred_check
      _
    $region35: #{model_forward.1} parent=1 // pred_check_branch
      %46 = sbr.rel (0) target = $region37
    $region36: #{model_forward.1} parent=1 // pred_region
      _
    $region37: #{model_forward.1} parent=1 // pred_fallthru
      _
    // Predicated region
    $region38: #{model_forward.1} parent=1 // pred_check
      _
    $region39: #{model_forward.1} parent=1 // pred_check_branch
      %48 = sbr.rel (0) target = $region41
    $region40: #{model_forward.1} parent=1 // pred_region
      _
    $region41: #{model_forward.1} parent=1 // pred_fallthru
      _
    // Predicated region
    $region42: #{model_forward.1} parent=1 // pred_check
      _
    $region43: #{model_forward.1} parent=1 // pred_check_branch
      %50 = sbr.rel (0) target = $region45
    $region44: #{model_forward.1} parent=1 // pred_region
      _
    $region45: #{model_forward.1} parent=1 // pred_fallthru
      _
    // Predicated region
    $region46: #{model_forward.1} parent=1 // pred_check
      _
    $region47: #{model_forward.1} parent=1 // pred_check_branch
      %52 = sbr.rel (0) target = $region49
    $region48: #{model_forward.1} parent=1 // pred_region
      _
    $region49: #{model_forward.1} parent=1 // pred_fallthru
      _
    // Predicated region
    $region50: #{model_forward.1} parent=1 // pred_check
      _
    $region51: #{model_forward.1} parent=1 // pred_check_branch
      %54 = sbr.rel (0) target = $region53
    $region52: #{model_forward.1} parent=1 // pred_region
      _
    $region53: #{model_forward.1} parent=1 // pred_fallthru
      _
    // Predicated region
    $region54: #{model_forward.1} parent=1 // pred_check
      _
    $region55: #{model_forward.1} parent=1 // pred_check_branch
      %56 = sbr.rel (0) target = $region57
    $region56: #{model_forward.1} parent=1 // pred_region
      _
    $region57: #{model_forward.1} parent=1 // pred_fallthru
      _
    // Predicated region
    $region58: #{model_forward.1} parent=1 // pred_check
      _
    $region59: #{model_forward.1} parent=1 // pred_check_branch
      %58 = sbr.rel (0) target = $region61
    $region60: #{model_forward.1} parent=1 // pred_region
      _
    $region61: #{model_forward.1} parent=1 // pred_fallthru
      _
    // Predicated region
    $region62: #{model_forward.1} parent=1 // pred_check
      _
    $region63: #{model_forward.1} parent=1 // pred_check_branch
      %60 = sbr.rel (0) target = $region65
    $region64: #{model_forward.1} parent=1 // pred_region
      _
    $region65: #{model_forward.1} parent=1 // pred_fallthru
      _
    // Predicated region
    $region66: #{model_forward.1} parent=1 // pred_check
      _
    $region67: #{model_forward.1} parent=1 // pred_check_branch
      %62 = sbr.rel (0) target = $region69
    $region68: #{model_forward.1} parent=1 // pred_region
      _
    $region69: #{model_forward.1} parent=1 // pred_fallthru
      _
    // Predicated region
    $region70: #{model_forward.1} parent=1 // pred_check
      _
    $region71: #{model_forward.1} parent=1 // pred_check_branch
      %64 = sbr.rel (0) target = $region73
    $region72: #{model_forward.1} parent=1 // pred_region
      _
    $region73: #{model_forward.1} parent=1 // pred_fallthru
      _
    // Predicated region
    $region74: #{model_forward.1} parent=1 // pred_check
      _
    $region75: #{model_forward.1} parent=1 // pred_check_branch
      %66 = sbr.rel (0) target = $region77
    $region76: #{model_forward.1} parent=1 // pred_region
      _
    $region77: #{model_forward.1} parent=1 // pred_fallthru
      _
    // Predicated region
    $region78: #{model_forward.1} parent=1 // pred_check
      _
    $region79: #{model_forward.1} parent=1 // pred_check_branch
      %68 = sbr.rel (0) target = $region81
    $region80: #{model_forward.1} parent=1 // pred_region
      _
    $region81: #{model_forward.1} parent=1 // pred_fallthru
      _
    // Predicated region
    $region82: #{model_forward.1} parent=1 // pred_check
      _
    $region83: #{model_forward.1} parent=1 // pred_check_branch
      %70 = sbr.rel (0) target = $region85
    $region84: #{model_forward.1} parent=1 // pred_region
      _
    $region85: #{model_forward.1} parent=1 // pred_fallthru
      _
    // Predicated region
    $region86: #{model_forward.1} parent=1 // pred_check
      _
    $region87: #{model_forward.1} parent=1 // pred_check_branch
      %72 = sbr.rel (0) target = $region89
    $region88: #{model_forward.1} parent=1 // pred_region
      _
    $region89: #{model_forward.1} parent=1 // pred_fallthru
      _
    %v73 = vld [vmem:[%s0] sm:$0xff]
    %v74 = vld [vmem:[%s0 + $0x8] sm:$0xff]
    %v75 = vld [vmem:[%s1] sm:$0xff]
    %v76 = vld [vmem:[%s1 + $0x8] sm:$0xff]
    %v77 = vld [vmem:[%s2] sm:$0xff]
    %v78 = vld [vmem:[%s2 + $0x8] sm:$0xff]
    %v79 = vld [vmem:[%s7] sm:$0x1]
    %s80 = sld [smem:[#allocation3]]
    %v81 = vadd.f32 %v75, %v77
    %v82 = vadd.f32 %v76, %v78
    %vm83 = vcmp.eq.f32.partialorder %v81, 0.0
    %vm84 = vcmp.eq.f32.partialorder %v82, 0.0
    %v86 = vlaneseq
    %v87 = vshrl.u32 %v86, 7
    %v88 = vsub.s32 0, %v87
    %v89 = vrot.slane %v79, %v88
    %v91 = vmul.f32 %v73, %v89
    %v92 = vmul.f32 %v74, %v89
    %vm93 = vcmask 261120
    %v94 = vsel %vm93, %v91, 0.0
    %95 = vadd.xlane.f32.xlu0 %v94
    %v96 = vpop.xlane.xlu0 %95
    %v97 = vsel %vm93, %v92, 0.0
    %98 = vadd.xlane.f32.xlu0 %v97
    %v99 = vpop.xlane.xlu0 %98
    %100 = vrot.lane.b32.xlu0 %v89, 96
    %v101 = vpop.permute.xlu0 %100
    %v103 = vmul.f32 %v73, %v101
    %v104 = vmul.f32 %v74, %v101
    %v105 = vsel %vm93, %v103, 0.0
    %106 = vadd.xlane.f32.xlu0 %v105
    %v107 = vpop.xlane.xlu0 %106
    %v108 = vsel %vm93, %v104, 0.0
    %109 = vadd.xlane.f32.xlu0 %v108
    %v110 = vpop.xlane.xlu0 %109
    %v111 = vsel %vm93, %v79, 0
    %v114 = vsel %vm93, %v73, 0
    %116 = vmatprep.subr.mxu0 0.0
    %117 = vmatpush1.xpose.msra.mxu0 0.0
    %118 = vmatprep.subr.mxu0 0.0
    %119 = vmatpush1.xpose.msra.mxu0 0.0
    %120 = vmatprep.subr.mxu0 0.0
    %121 = vmatpush1.xpose.msra.mxu0 0.0
    %122 = vmatprep.subr.mxu0 0.0
    %123 = vmatpush1.xpose.msra.mxu0 0.0
    %124 = vmatprep.subr.mxu0 0.0
    %125 = vmatpush1.xpose.msra.mxu0 0.0
    %126 = vmatprep.subr.mxu0 0.0
    %127 = vmatpush1.xpose.msra.mxu0 0.0
    %128 = vmatprep.subr.mxu0 0.0
    %129 = vmatpush1.xpose.msra.mxu0 0.0
    %130 = vmatprep.subr.mxu0 0.0
    %131 = vmatpush1.xpose.msra.mxu0 0.0
    %132 = vmatprep.subr.mxu0 0.0
    %133 = vmatpush1.xpose.msra.mxu0 0.0
    %134 = vmatprep.subr.mxu0 0.0
    %135 = vmatpush1.xpose.msra.mxu0 0.0
    %136 = vmatprep.subr.mxu0 0.0
    %137 = vmatpush1.xpose.msra.mxu0 0.0
    %138 = vmatprep.subr.mxu0 0.0
    %139 = vmatpush1.xpose.msra.mxu0 0.0
    %140 = vmatprep.subr.mxu0 0.0
    %141 = vmatpush1.xpose.msra.mxu0 0.0
    %142 = vmatprep.subr.mxu0 0.0
    %143 = vmatpush1.xpose.msra.mxu0 0.0
    %144 = vmatprep.subr.mxu0 0.0
    %145 = vmatpush1.xpose.msra.mxu0 0.0
    %146 = vmatprep.subr.mxu0 0.0
    %147 = vmatpush1.xpose.msra.mxu0 %v114
    %148 = vmatprep.subr.mxu0 0.0
    %149 = vmatpush2.xpose.msra.mxu0 0.0
    %150 = vmatprep.subr.mxu0 0.0
    %151 = vmatpush2.xpose.msra.mxu0 0.0
    %152 = vmatprep.subr.mxu0 0.0
    %153 = vmatpush2.xpose.msra.mxu0 0.0
    %154 = vmatprep.subr.mxu0 0.0
    %155 = vmatpush2.xpose.msra.mxu0 0.0
    %156 = vmatprep.subr.mxu0 0.0
    %157 = vmatpush2.xpose.msra.mxu0 0.0
    %158 = vmatprep.subr.mxu0 0.0
    %159 = vmatpush2.xpose.msra.mxu0 0.0
    %160 = vmatprep.subr.mxu0 0.0
    %161 = vmatpush2.xpose.msra.mxu0 0.0
    %162 = vmatprep.subr.mxu0 0.0
    %163 = vmatpush2.xpose.msra.mxu0 0.0
    %164 = vmatprep.subr.mxu0 0.0
    %165 = vmatpush2.xpose.msra.mxu0 0.0
    %166 = vmatprep.subr.mxu0 0.0
    %167 = vmatpush2.xpose.msra.mxu0 0.0
    %168 = vmatprep.subr.mxu0 0.0
    %169 = vmatpush2.xpose.msra.mxu0 0.0
    %170 = vmatprep.subr.mxu0 0.0
    %171 = vmatpush2.xpose.msra.mxu0 0.0
    %172 = vmatprep.subr.mxu0 0.0
    %173 = vmatpush2.xpose.msra.mxu0 0.0
    %174 = vmatprep.subr.mxu0 0.0
    %175 = vmatpush2.xpose.msra.mxu0 0.0
    %176 = vmatprep.subr.mxu0 0.0
    %177 = vmatpush2.xpose.msra.mxu0 0.0
    %178 = vmatprep.subr.mxu0 0.0
    %179 = vmatpush2.xpose.msra.mxu0 0.0
    %180 = vmatprep.mubr.f32.mxu0 0.0
    %181 = vmatmul.mubr.f32.gmra.mxu0 %v111
    %v182 = vpop.f32.mrf.mxu0
    %v183 = vadd.f32 0.0, %v182
    %v184 = vpop.f32.mrf.mxu0
    %185 = vdwg.mxu0
    %v187 = vsel %vm93, %v74, 0
    %189 = vmatprep.subr.mxu0 0.0
    %190 = vmatpush1.xpose.msra.mxu0 0.0
    %191 = vmatprep.subr.mxu0 0.0
    %192 = vmatpush1.xpose.msra.mxu0 0.0
    %193 = vmatprep.subr.mxu0 0.0
    %194 = vmatpush1.xpose.msra.mxu0 0.0
    %195 = vmatprep.subr.mxu0 0.0
    %196 = vmatpush1.xpose.msra.mxu0 0.0
    %197 = vmatprep.subr.mxu0 0.0
    %198 = vmatpush1.xpose.msra.mxu0 0.0
    %199 = vmatprep.subr.mxu0 0.0
    %200 = vmatpush1.xpose.msra.mxu0 0.0
    %201 = vmatprep.subr.mxu0 0.0
    %202 = vmatpush1.xpose.msra.mxu0 0.0
    %203 = vmatprep.subr.mxu0 0.0
    %204 = vmatpush1.xpose.msra.mxu0 0.0
    %205 = vmatprep.subr.mxu0 0.0
    %206 = vmatpush1.xpose.msra.mxu0 0.0
    %207 = vmatprep.subr.mxu0 0.0
    %208 = vmatpush1.xpose.msra.mxu0 0.0
    %209 = vmatprep.subr.mxu0 0.0
    %210 = vmatpush1.xpose.msra.mxu0 0.0
    %211 = vmatprep.subr.mxu0 0.0
    %212 = vmatpush1.xpose.msra.mxu0 0.0
    %213 = vmatprep.subr.mxu0 0.0
    %214 = vmatpush1.xpose.msra.mxu0 0.0
    %215 = vmatprep.subr.mxu0 0.0
    %216 = vmatpush1.xpose.msra.mxu0 0.0
    %217 = vmatprep.subr.mxu0 0.0
    %218 = vmatpush1.xpose.msra.mxu0 0.0
    %219 = vmatprep.subr.mxu0 0.0
    %220 = vmatpush1.xpose.msra.mxu0 %v187
    %221 = vmatprep.subr.mxu0 0.0
    %222 = vmatpush2.xpose.msra.mxu0 0.0
    %223 = vmatprep.subr.mxu0 0.0
    %224 = vmatpush2.xpose.msra.mxu0 0.0
    %225 = vmatprep.subr.mxu0 0.0
    %226 = vmatpush2.xpose.msra.mxu0 0.0
    %227 = vmatprep.subr.mxu0 0.0
    %228 = vmatpush2.xpose.msra.mxu0 0.0
    %229 = vmatprep.subr.mxu0 0.0
    %230 = vmatpush2.xpose.msra.mxu0 0.0
    %231 = vmatprep.subr.mxu0 0.0
    %232 = vmatpush2.xpose.msra.mxu0 0.0
    %233 = vmatprep.subr.mxu0 0.0
    %234 = vmatpush2.xpose.msra.mxu0 0.0
    %235 = vmatprep.subr.mxu0 0.0
    %236 = vmatpush2.xpose.msra.mxu0 0.0
    %237 = vmatprep.subr.mxu0 0.0
    %238 = vmatpush2.xpose.msra.mxu0 0.0
    %239 = vmatprep.subr.mxu0 0.0
    %240 = vmatpush2.xpose.msra.mxu0 0.0
    %241 = vmatprep.subr.mxu0 0.0
    %242 = vmatpush2.xpose.msra.mxu0 0.0
    %243 = vmatprep.subr.mxu0 0.0
    %244 = vmatpush2.xpose.msra.mxu0 0.0
    %245 = vmatprep.subr.mxu0 0.0
    %246 = vmatpush2.xpose.msra.mxu0 0.0
    %247 = vmatprep.subr.mxu0 0.0
    %248 = vmatpush2.xpose.msra.mxu0 0.0
    %249 = vmatprep.subr.mxu0 0.0
    %250 = vmatpush2.xpose.msra.mxu0 0.0
    %251 = vmatprep.subr.mxu0 0.0
    %252 = vmatpush2.xpose.msra.mxu0 0.0
    %253 = vmatprep.mubr.f32.mxu0 0.0
    %254 = vmatmul.mubr.f32.gmra.mxu0 %v111
    %v255 = vpop.f32.mrf.mxu0
    %v256 = vadd.f32 0.0, %v255
    %v257 = vpop.f32.mrf.mxu0
    %258 = vdwg.mxu0
    %v259 = vsel %vm93, %v101, 0
    %261 = vmatprep.subr.mxu0 0.0
    %262 = vmatpush1.xpose.msra.mxu0 0.0
    %263 = vmatprep.subr.mxu0 0.0
    %264 = vmatpush1.xpose.msra.mxu0 0.0
    %265 = vmatprep.subr.mxu0 0.0
    %266 = vmatpush1.xpose.msra.mxu0 0.0
    %267 = vmatprep.subr.mxu0 0.0
    %268 = vmatpush1.xpose.msra.mxu0 0.0
    %269 = vmatprep.subr.mxu0 0.0
    %270 = vmatpush1.xpose.msra.mxu0 0.0
    %271 = vmatprep.subr.mxu0 0.0
    %272 = vmatpush1.xpose.msra.mxu0 0.0
    %273 = vmatprep.subr.mxu0 0.0
    %274 = vmatpush1.xpose.msra.mxu0 0.0
    %275 = vmatprep.subr.mxu0 0.0
    %276 = vmatpush1.xpose.msra.mxu0 0.0
    %277 = vmatprep.subr.mxu0 0.0
    %278 = vmatpush1.xpose.msra.mxu0 0.0
    %279 = vmatprep.subr.mxu0 0.0
    %280 = vmatpush1.xpose.msra.mxu0 0.0
    %281 = vmatprep.subr.mxu0 0.0
    %282 = vmatpush1.xpose.msra.mxu0 0.0
    %283 = vmatprep.subr.mxu0 0.0
    %284 = vmatpush1.xpose.msra.mxu0 0.0
    %285 = vmatprep.subr.mxu0 0.0
    %286 = vmatpush1.xpose.msra.mxu0 0.0
    %287 = vmatprep.subr.mxu0 0.0
    %288 = vmatpush1.xpose.msra.mxu0 0.0
    %289 = vmatprep.subr.mxu0 0.0
    %290 = vmatpush1.xpose.msra.mxu0 0.0
    %291 = vmatprep.subr.mxu0 0.0
    %292 = vmatpush1.xpose.msra.mxu0 %v114
    %293 = vmatprep.subr.mxu0 0.0
    %294 = vmatpush2.xpose.msra.mxu0 0.0
    %295 = vmatprep.subr.mxu0 0.0
    %296 = vmatpush2.xpose.msra.mxu0 0.0
    %297 = vmatprep.subr.mxu0 0.0
    %298 = vmatpush2.xpose.msra.mxu0 0.0
    %299 = vmatprep.subr.mxu0 0.0
    %300 = vmatpush2.xpose.msra.mxu0 0.0
    %301 = vmatprep.subr.mxu0 0.0
    %302 = vmatpush2.xpose.msra.mxu0 0.0
    %303 = vmatprep.subr.mxu0 0.0
    %304 = vmatpush2.xpose.msra.mxu0 0.0
    %305 = vmatprep.subr.mxu0 0.0
    %306 = vmatpush2.xpose.msra.mxu0 0.0
    %307 = vmatprep.subr.mxu0 0.0
    %308 = vmatpush2.xpose.msra.mxu0 0.0
    %309 = vmatprep.subr.mxu0 0.0
    %310 = vmatpush2.xpose.msra.mxu0 0.0
    %311 = vmatprep.subr.mxu0 0.0
    %312 = vmatpush2.xpose.msra.mxu0 0.0
    %313 = vmatprep.subr.mxu0 0.0
    %314 = vmatpush2.xpose.msra.mxu0 0.0
    %315 = vmatprep.subr.mxu0 0.0
    %316 = vmatpush2.xpose.msra.mxu0 0.0
    %317 = vmatprep.subr.mxu0 0.0
    %318 = vmatpush2.xpose.msra.mxu0 0.0
    %319 = vmatprep.subr.mxu0 0.0
    %320 = vmatpush2.xpose.msra.mxu0 0.0
    %321 = vmatprep.subr.mxu0 0.0
    %322 = vmatpush2.xpose.msra.mxu0 0.0
    %323 = vmatprep.subr.mxu0 0.0
    %324 = vmatpush2.xpose.msra.mxu0 0.0
    %325 = vmatprep.mubr.f32.mxu0 0.0
    %326 = vmatmul.mubr.f32.gmra.mxu0 %v259
    %v327 = vpop.f32.mrf.mxu0
    %v328 = vadd.f32 0.0, %v327
    %v329 = vpop.f32.mrf.mxu0
    %330 = vdwg.mxu0
    %331 = vmatprep.subr.mxu0 0.0
    %332 = vmatpush1.xpose.msra.mxu0 0.0
    %333 = vmatprep.subr.mxu0 0.0
    %334 = vmatpush1.xpose.msra.mxu0 0.0
    %335 = vmatprep.subr.mxu0 0.0
    %336 = vmatpush1.xpose.msra.mxu0 0.0
    %337 = vmatprep.subr.mxu0 0.0
    %338 = vmatpush1.xpose.msra.mxu0 0.0
    %339 = vmatprep.subr.mxu0 0.0
    %340 = vmatpush1.xpose.msra.mxu0 0.0
    %341 = vmatprep.subr.mxu0 0.0
    %342 = vmatpush1.xpose.msra.mxu0 0.0
    %343 = vmatprep.subr.mxu0 0.0
    %344 = vmatpush1.xpose.msra.mxu0 0.0
    %345 = vmatprep.subr.mxu0 0.0
    %346 = vmatpush1.xpose.msra.mxu0 0.0
    %347 = vmatprep.subr.mxu0 0.0
    %348 = vmatpush1.xpose.msra.mxu0 0.0
    %349 = vmatprep.subr.mxu0 0.0
    %350 = vmatpush1.xpose.msra.mxu0 0.0
    %351 = vmatprep.subr.mxu0 0.0
    %352 = vmatpush1.xpose.msra.mxu0 0.0
    %353 = vmatprep.subr.mxu0 0.0
    %354 = vmatpush1.xpose.msra.mxu0 0.0
    %355 = vmatprep.subr.mxu0 0.0
    %356 = vmatpush1.xpose.msra.mxu0 0.0
    %357 = vmatprep.subr.mxu0 0.0
    %358 = vmatpush1.xpose.msra.mxu0 0.0
    %359 = vmatprep.subr.mxu0 0.0
    %360 = vmatpush1.xpose.msra.mxu0 0.0
    %361 = vmatprep.subr.mxu0 0.0
    %362 = vmatpush1.xpose.msra.mxu0 %v187
    %363 = vmatprep.subr.mxu0 0.0
    %364 = vmatpush2.xpose.msra.mxu0 0.0
    %365 = vmatprep.subr.mxu0 0.0
    %366 = vmatpush2.xpose.msra.mxu0 0.0
    %367 = vmatprep.subr.mxu0 0.0
    %368 = vmatpush2.xpose.msra.mxu0 0.0
    %369 = vmatprep.subr.mxu0 0.0
    %370 = vmatpush2.xpose.msra.mxu0 0.0
    %371 = vmatprep.subr.mxu0 0.0
    %372 = vmatpush2.xpose.msra.mxu0 0.0
    %373 = vmatprep.subr.mxu0 0.0
    %374 = vmatpush2.xpose.msra.mxu0 0.0
    %375 = vmatprep.subr.mxu0 0.0
    %376 = vmatpush2.xpose.msra.mxu0 0.0
    %377 = vmatprep.subr.mxu0 0.0
    %378 = vmatpush2.xpose.msra.mxu0 0.0
    %379 = vmatprep.subr.mxu0 0.0
    %380 = vmatpush2.xpose.msra.mxu0 0.0
    %381 = vmatprep.subr.mxu0 0.0
    %382 = vmatpush2.xpose.msra.mxu0 0.0
    %383 = vmatprep.subr.mxu0 0.0
    %384 = vmatpush2.xpose.msra.mxu0 0.0
    %385 = vmatprep.subr.mxu0 0.0
    %386 = vmatpush2.xpose.msra.mxu0 0.0
    %387 = vmatprep.subr.mxu0 0.0
    %388 = vmatpush2.xpose.msra.mxu0 0.0
    %389 = vmatprep.subr.mxu0 0.0
    %390 = vmatpush2.xpose.msra.mxu0 0.0
    %391 = vmatprep.subr.mxu0 0.0
    %392 = vmatpush2.xpose.msra.mxu0 0.0
    %393 = vmatprep.subr.mxu0 0.0
    %394 = vmatpush2.xpose.msra.mxu0 0.0
    %395 = vmatprep.mubr.f32.mxu0 0.0
    %396 = vmatmul.mubr.f32.gmra.mxu0 %v259
    %v397 = vpop.f32.mrf.mxu0
    %v398 = vadd.f32 0.0, %v397
    %v399 = vpop.f32.mrf.mxu0
    %400 = vdwg.mxu0
    %v401 = vlaneseq
    %v402 = vshrl.u32 %v401, 7
    %v403 = vsub.s32 0, %v402
    %v404 = vrot.slane %v328, %v403
    %v405 = vlaneseq
    %v406 = vshrl.u32 %v405, 7
    %v407 = vsub.s32 0, %v406
    %v408 = vrot.slane %v398, %v407
    %v409 = vadd.f32 %v96, %v404
    %v410 = vadd.f32 %v99, %v408
    %v411 = vstv %s80
    %v412 = vadd.f32 %v409, %v411
    %v413 = vadd.f32 %v410, %v411
    %v414 = vtanh.pop %v412
    %v415 = vtanh.pop %v413
    %v416 = vlaneseq
    %v417 = vshrl.u32 %v416, 7
    %v418 = vsub.s32 0, %v417
    %v419 = vrot.slane %v183, %v418
    %v420 = vlaneseq
    %v421 = vshrl.u32 %v420, 7
    %v422 = vsub.s32 0, %v421
    %v423 = vrot.slane %v256, %v422
    %v424 = vadd.f32 %v107, %v419
    %v425 = vadd.f32 %v110, %v423
    %v426 = vadd.f32 %v424, %v411
    %v427 = vadd.f32 %v425, %v411
    %v428 = vtanh.pop %v426
    %v429 = vtanh.pop %v427
    %vm430 = vcmp.eq.f32.partialorder %v75, 1.0
    %vm431 = vcmp.eq.f32.partialorder %v76, 1.0
    %v432 = vsel %vm430, %v414, 0.0
    %v433 = vsel %vm431, %v415, 0.0
    %vm434 = vcmp.eq.f32.partialorder %v77, 1.0
    %vm435 = vcmp.eq.f32.partialorder %v78, 1.0
    %v436 = vsel %vm434, %v428, 0.0
    %v437 = vsel %vm435, %v429, 0.0
    %v438 = vadd.f32 %v432, %v436
    %v439 = vadd.f32 %v433, %v437
    %v440 = vmul.f32 %v438, 0.5
    %v441 = vmul.f32 %v439, 0.5
    %v442 = vsel %vm83, -9e+15, %v440
    %v443 = vsel %vm84, -9e+15, %v441
    %vm444 = vcmask 64512
    %v445 = vsel %vm444, %v442, -inf
    %446 = vmax.xlane.f32.xlu0 %v445
    %v447 = vpop.xlane.xlu0 %446
    %v448 = vsel %vm444, %v443, -inf
    %449 = vmax.xlane.f32.xlu0 %v448
    %v450 = vpop.xlane.xlu0 %449
    %v451 = vsub.f32 %v442, %v447
    %v452 = vsub.f32 %v443, %v450
    %v453 = vmul.f32 %v451, 1.442695
    %v454 = vpow.pop %v453
    %v455 = vmul.f32 %v452, 1.442695
    %v456 = vpow.pop %v455
    %v457 = vsel %vm444, %v454, 0.0
    %458 = vadd.xlane.f32.xlu0 %v457
    %v459 = vpop.xlane.xlu0 %458
    %v460 = vsel %vm444, %v456, 0.0
    %461 = vadd.xlane.f32.xlu0 %v460
    %v462 = vpop.xlane.xlu0 %461
    %v463 = vrcp.pop %v459
    %v464 = vmul.f32 %v454, %v463
    %v465 = vrcp.pop %v462
    %v466 = vmul.f32 %v456, %v465
    %v468 = vsel %vm444, %v464, 0
    %470 = vmatprep.subr.mxu0 0.0
    %471 = vmatpush1.msra.mxu0 0.0
    %472 = vmatprep.subr.mxu0 0.0
    %473 = vmatpush1.msra.mxu0 0.0
    %474 = vmatprep.subr.mxu0 0.0
    %475 = vmatpush1.msra.mxu0 0.0
    %476 = vmatprep.subr.mxu0 0.0
    %477 = vmatpush1.msra.mxu0 0.0
    %478 = vmatprep.subr.mxu0 0.0
    %479 = vmatpush1.msra.mxu0 0.0
    %480 = vmatprep.subr.mxu0 0.0
    %481 = vmatpush1.msra.mxu0 0.0
    %482 = vmatprep.subr.mxu0 0.0
    %483 = vmatpush1.msra.mxu0 0.0
    %484 = vmatprep.subr.mxu0 0.0
    %485 = vmatpush1.msra.mxu0 0.0
    %486 = vmatprep.subr.mxu0 0.0
    %487 = vmatpush1.msra.mxu0 0.0
    %488 = vmatprep.subr.mxu0 0.0
    %489 = vmatpush1.msra.mxu0 0.0
    %490 = vmatprep.subr.mxu0 0.0
    %491 = vmatpush1.msra.mxu0 0.0
    %492 = vmatprep.subr.mxu0 0.0
    %493 = vmatpush1.msra.mxu0 0.0
    %494 = vmatprep.subr.mxu0 0.0
    %495 = vmatpush1.msra.mxu0 0.0
    %496 = vmatprep.subr.mxu0 0.0
    %497 = vmatpush1.msra.mxu0 0.0
    %498 = vmatprep.subr.mxu0 0.0
    %499 = vmatpush1.msra.mxu0 0.0
    %500 = vmatprep.subr.mxu0 0.0
    %501 = vmatpush1.msra.mxu0 %v73
    %502 = vmatprep.subr.mxu0 0.0
    %503 = vmatpush2.msra.mxu0 0.0
    %504 = vmatprep.subr.mxu0 0.0
    %505 = vmatpush2.msra.mxu0 0.0
    %506 = vmatprep.subr.mxu0 0.0
    %507 = vmatpush2.msra.mxu0 0.0
    %508 = vmatprep.subr.mxu0 0.0
    %509 = vmatpush2.msra.mxu0 0.0
    %510 = vmatprep.subr.mxu0 0.0
    %511 = vmatpush2.msra.mxu0 0.0
    %512 = vmatprep.subr.mxu0 0.0
    %513 = vmatpush2.msra.mxu0 0.0
    %514 = vmatprep.subr.mxu0 0.0
    %515 = vmatpush2.msra.mxu0 0.0
    %516 = vmatprep.subr.mxu0 0.0
    %517 = vmatpush2.msra.mxu0 0.0
    %518 = vmatprep.subr.mxu0 0.0
    %519 = vmatpush2.msra.mxu0 0.0
    %520 = vmatprep.subr.mxu0 0.0
    %521 = vmatpush2.msra.mxu0 0.0
    %522 = vmatprep.subr.mxu0 0.0
    %523 = vmatpush2.msra.mxu0 0.0
    %524 = vmatprep.subr.mxu0 0.0
    %525 = vmatpush2.msra.mxu0 0.0
    %526 = vmatprep.subr.mxu0 0.0
    %527 = vmatpush2.msra.mxu0 0.0
    %528 = vmatprep.subr.mxu0 0.0
    %529 = vmatpush2.msra.mxu0 0.0
    %530 = vmatprep.subr.mxu0 0.0
    %531 = vmatpush2.msra.mxu0 0.0
    %532 = vmatprep.subr.mxu0 0.0
    %533 = vmatpush2.msra.mxu0 0.0
    %534 = vmatprep.mubr.f32.mxu0 0.0
    %535 = vmatmul.mubr.f32.gmra.mxu0 %v468
    %v536 = vpop.f32.mrf.mxu0
    %v537 = vadd.f32 0.0, %v536
    %v538 = vpop.f32.mrf.mxu0
    %539 = vdwg.mxu0
    %v541 = vsel %vm444, %v466, 0
    %543 = vmatprep.subr.mxu0 0.0
    %544 = vmatpush1.msra.mxu0 0.0
    %545 = vmatprep.subr.mxu0 0.0
    %546 = vmatpush1.msra.mxu0 0.0
    %547 = vmatprep.subr.mxu0 0.0
    %548 = vmatpush1.msra.mxu0 0.0
    %549 = vmatprep.subr.mxu0 0.0
    %550 = vmatpush1.msra.mxu0 0.0
    %551 = vmatprep.subr.mxu0 0.0
    %552 = vmatpush1.msra.mxu0 0.0
    %553 = vmatprep.subr.mxu0 0.0
    %554 = vmatpush1.msra.mxu0 0.0
    %555 = vmatprep.subr.mxu0 0.0
    %556 = vmatpush1.msra.mxu0 0.0
    %557 = vmatprep.subr.mxu0 0.0
    %558 = vmatpush1.msra.mxu0 0.0
    %559 = vmatprep.subr.mxu0 0.0
    %560 = vmatpush1.msra.mxu0 0.0
    %561 = vmatprep.subr.mxu0 0.0
    %562 = vmatpush1.msra.mxu0 0.0
    %563 = vmatprep.subr.mxu0 0.0
    %564 = vmatpush1.msra.mxu0 0.0
    %565 = vmatprep.subr.mxu0 0.0
    %566 = vmatpush1.msra.mxu0 0.0
    %567 = vmatprep.subr.mxu0 0.0
    %568 = vmatpush1.msra.mxu0 0.0
    %569 = vmatprep.subr.mxu0 0.0
    %570 = vmatpush1.msra.mxu0 0.0
    %571 = vmatprep.subr.mxu0 0.0
    %572 = vmatpush1.msra.mxu0 0.0
    %573 = vmatprep.subr.mxu0 0.0
    %574 = vmatpush1.msra.mxu0 %v74
    %575 = vmatprep.subr.mxu0 0.0
    %576 = vmatpush2.msra.mxu0 0.0
    %577 = vmatprep.subr.mxu0 0.0
    %578 = vmatpush2.msra.mxu0 0.0
    %579 = vmatprep.subr.mxu0 0.0
    %580 = vmatpush2.msra.mxu0 0.0
    %581 = vmatprep.subr.mxu0 0.0
    %582 = vmatpush2.msra.mxu0 0.0
    %583 = vmatprep.subr.mxu0 0.0
    %584 = vmatpush2.msra.mxu0 0.0
    %585 = vmatprep.subr.mxu0 0.0
    %586 = vmatpush2.msra.mxu0 0.0
    %587 = vmatprep.subr.mxu0 0.0
    %588 = vmatpush2.msra.mxu0 0.0
    %589 = vmatprep.subr.mxu0 0.0
    %590 = vmatpush2.msra.mxu0 0.0
    %591 = vmatprep.subr.mxu0 0.0
    %592 = vmatpush2.msra.mxu0 0.0
    %593 = vmatprep.subr.mxu0 0.0
    %594 = vmatpush2.msra.mxu0 0.0
    %595 = vmatprep.subr.mxu0 0.0
    %596 = vmatpush2.msra.mxu0 0.0
    %597 = vmatprep.subr.mxu0 0.0
    %598 = vmatpush2.msra.mxu0 0.0
    %599 = vmatprep.subr.mxu0 0.0
    %600 = vmatpush2.msra.mxu0 0.0
    %601 = vmatprep.subr.mxu0 0.0
    %602 = vmatpush2.msra.mxu0 0.0
    %603 = vmatprep.subr.mxu0 0.0
    %604 = vmatpush2.msra.mxu0 0.0
    %605 = vmatprep.subr.mxu0 0.0
    %606 = vmatpush2.msra.mxu0 0.0
    %607 = vmatprep.mubr.f32.mxu0 0.0
    %608 = vmatmul.mubr.f32.gmra.mxu0 %v541
    %v609 = vpop.f32.mrf.mxu0
    %v610 = vadd.f32 0.0, %v609
    %v611 = vpop.f32.mrf.mxu0
    %612 = vdwg.mxu0
    %v613 = vld [vmem:[%s3] sm:$0xff]
    %v614 = vld [vmem:[%s3 + $0x8] sm:$0xff]
    %v615 = vlaneseq
    %v616 = vand.u32 %v615, 127
    %617 = vset.pattern.permute.xlu0 0
    %618 = vperm.xlu0 %617, %v613
    %v619 = vpop.permute.xlu0 %618
    %620 = vset.pattern.permute.xlu0 0
    %621 = vperm.xlu0 %620, %v614
    %v622 = vpop.permute.xlu0 %621
    %vm623 = vcmp.eq.s32.totalorder %v619, %v616
    %vm624 = vcmp.eq.s32.totalorder %v622, %v616
    %v625 = vsel %vm623, 1, 0
    %v626 = vsel %vm624, 1, 0
    %v627 = vcvt.s32.f32 %v625
    %v628 = vcvt.s32.f32 %v626
    %v630 = vsel %vm444, %v627, 0
    %632 = vmatprep.subr.mxu0 0.0
    %633 = vmatpush1.msra.mxu0 0.0
    %634 = vmatprep.subr.mxu0 0.0
    %635 = vmatpush1.msra.mxu0 0.0
    %636 = vmatprep.subr.mxu0 0.0
    %637 = vmatpush1.msra.mxu0 0.0
    %638 = vmatprep.subr.mxu0 0.0
    %639 = vmatpush1.msra.mxu0 0.0
    %640 = vmatprep.subr.mxu0 0.0
    %641 = vmatpush1.msra.mxu0 0.0
    %642 = vmatprep.subr.mxu0 0.0
    %643 = vmatpush1.msra.mxu0 0.0
    %644 = vmatprep.subr.mxu0 0.0
    %645 = vmatpush1.msra.mxu0 0.0
    %646 = vmatprep.subr.mxu0 0.0
    %647 = vmatpush1.msra.mxu0 0.0
    %648 = vmatprep.subr.mxu0 0.0
    %649 = vmatpush1.msra.mxu0 0.0
    %650 = vmatprep.subr.mxu0 0.0
    %651 = vmatpush1.msra.mxu0 0.0
    %652 = vmatprep.subr.mxu0 0.0
    %653 = vmatpush1.msra.mxu0 0.0
    %654 = vmatprep.subr.mxu0 0.0
    %655 = vmatpush1.msra.mxu0 0.0
    %656 = vmatprep.subr.mxu0 0.0
    %657 = vmatpush1.msra.mxu0 0.0
    %658 = vmatprep.subr.mxu0 0.0
    %659 = vmatpush1.msra.mxu0 0.0
    %660 = vmatprep.subr.mxu0 0.0
    %661 = vmatpush1.msra.mxu0 0.0
    %662 = vmatprep.subr.mxu0 0.0
    %663 = vmatpush1.msra.mxu0 %v537
    %664 = vmatprep.subr.mxu0 0.0
    %665 = vmatpush2.msra.mxu0 0.0
    %666 = vmatprep.subr.mxu0 0.0
    %667 = vmatpush2.msra.mxu0 0.0
    %668 = vmatprep.subr.mxu0 0.0
    %669 = vmatpush2.msra.mxu0 0.0
    %670 = vmatprep.subr.mxu0 0.0
    %671 = vmatpush2.msra.mxu0 0.0
    %672 = vmatprep.subr.mxu0 0.0
    %673 = vmatpush2.msra.mxu0 0.0
    %674 = vmatprep.subr.mxu0 0.0
    %675 = vmatpush2.msra.mxu0 0.0
    %676 = vmatprep.subr.mxu0 0.0
    %677 = vmatpush2.msra.mxu0 0.0
    %678 = vmatprep.subr.mxu0 0.0
    %679 = vmatpush2.msra.mxu0 0.0
    %680 = vmatprep.subr.mxu0 0.0
    %681 = vmatpush2.msra.mxu0 0.0
    %682 = vmatprep.subr.mxu0 0.0
    %683 = vmatpush2.msra.mxu0 0.0
    %684 = vmatprep.subr.mxu0 0.0
    %685 = vmatpush2.msra.mxu0 0.0
    %686 = vmatprep.subr.mxu0 0.0
    %687 = vmatpush2.msra.mxu0 0.0
    %688 = vmatprep.subr.mxu0 0.0
    %689 = vmatpush2.msra.mxu0 0.0
    %690 = vmatprep.subr.mxu0 0.0
    %691 = vmatpush2.msra.mxu0 0.0
    %692 = vmatprep.subr.mxu0 0.0
    %693 = vmatpush2.msra.mxu0 0.0
    %694 = vmatprep.subr.mxu0 0.0
    %695 = vmatpush2.msra.mxu0 0.0
    %696 = vmatprep.mubr.f32.mxu0 0.0
    %697 = vmatmul.mubr.f32.gmra.mxu0 %v630
    %v698 = vpop.f32.mrf.mxu0
    %v699 = vadd.f32 0.0, %v698
    %v700 = vpop.f32.mrf.mxu0
    %701 = vdwg.mxu0
    %v703 = vsel %vm444, %v628, 0
    %705 = vmatprep.subr.mxu0 0.0
    %706 = vmatpush1.msra.mxu0 0.0
    %707 = vmatprep.subr.mxu0 0.0
    %708 = vmatpush1.msra.mxu0 0.0
    %709 = vmatprep.subr.mxu0 0.0
    %710 = vmatpush1.msra.mxu0 0.0
    %711 = vmatprep.subr.mxu0 0.0
    %712 = vmatpush1.msra.mxu0 0.0
    %713 = vmatprep.subr.mxu0 0.0
    %714 = vmatpush1.msra.mxu0 0.0
    %715 = vmatprep.subr.mxu0 0.0
    %716 = vmatpush1.msra.mxu0 0.0
    %717 = vmatprep.subr.mxu0 0.0
    %718 = vmatpush1.msra.mxu0 0.0
    %719 = vmatprep.subr.mxu0 0.0
    %720 = vmatpush1.msra.mxu0 0.0
    %721 = vmatprep.subr.mxu0 0.0
    %722 = vmatpush1.msra.mxu0 0.0
    %723 = vmatprep.subr.mxu0 0.0
    %724 = vmatpush1.msra.mxu0 0.0
    %725 = vmatprep.subr.mxu0 0.0
    %726 = vmatpush1.msra.mxu0 0.0
    %727 = vmatprep.subr.mxu0 0.0
    %728 = vmatpush1.msra.mxu0 0.0
    %729 = vmatprep.subr.mxu0 0.0
    %730 = vmatpush1.msra.mxu0 0.0
    %731 = vmatprep.subr.mxu0 0.0
    %732 = vmatpush1.msra.mxu0 0.0
    %733 = vmatprep.subr.mxu0 0.0
    %734 = vmatpush1.msra.mxu0 0.0
    %735 = vmatprep.subr.mxu0 0.0
    %736 = vmatpush1.msra.mxu0 %v610
    %737 = vmatprep.subr.mxu0 0.0
    %738 = vmatpush2.msra.mxu0 0.0
    %739 = vmatprep.subr.mxu0 0.0
    %740 = vmatpush2.msra.mxu0 0.0
    %741 = vmatprep.subr.mxu0 0.0
    %742 = vmatpush2.msra.mxu0 0.0
    %743 = vmatprep.subr.mxu0 0.0
    %744 = vmatpush2.msra.mxu0 0.0
    %745 = vmatprep.subr.mxu0 0.0
    %746 = vmatpush2.msra.mxu0 0.0
    %747 = vmatprep.subr.mxu0 0.0
    %748 = vmatpush2.msra.mxu0 0.0
    %749 = vmatprep.subr.mxu0 0.0
    %750 = vmatpush2.msra.mxu0 0.0
    %751 = vmatprep.subr.mxu0 0.0
    %752 = vmatpush2.msra.mxu0 0.0
    %753 = vmatprep.subr.mxu0 0.0
    %754 = vmatpush2.msra.mxu0 0.0
    %755 = vmatprep.subr.mxu0 0.0
    %756 = vmatpush2.msra.mxu0 0.0
    %757 = vmatprep.subr.mxu0 0.0
    %758 = vmatpush2.msra.mxu0 0.0
    %759 = vmatprep.subr.mxu0 0.0
    %760 = vmatpush2.msra.mxu0 0.0
    %761 = vmatprep.subr.mxu0 0.0
    %762 = vmatpush2.msra.mxu0 0.0
    %763 = vmatprep.subr.mxu0 0.0
    %764 = vmatpush2.msra.mxu0 0.0
    %765 = vmatprep.subr.mxu0 0.0
    %766 = vmatpush2.msra.mxu0 0.0
    %767 = vmatprep.subr.mxu0 0.0
    %768 = vmatpush2.msra.mxu0 0.0
    %769 = vmatprep.mubr.f32.mxu0 0.0
    %770 = vmatmul.mubr.f32.gmra.mxu0 %v703
    %v771 = vpop.f32.mrf.mxu0
    %v772 = vadd.f32 0.0, %v771
    %v773 = vpop.f32.mrf.mxu0
    %774 = vdwg.mxu0
    %v775 = vld [vmem:[%s4] sm:$0xff]
    %v776 = vld [vmem:[%s4 + $0x8] sm:$0xff]
    %777 = vst.msk [vmem:[#allocation2] sm:$0xff] %vm93, 0.0
    %vm778 = vcmask 254976
    %779 = vst.msk [vmem:[#allocation2 + $0x8] sm:$0x3] %vm778, 0.0
    %780 = vst.msk [vmem:[#allocation2 + $0x10] sm:$0xff] %vm93, 0.0
    %781 = vst.msk [vmem:[#allocation2 + $0x18] sm:$0x3] %vm778, 0.0
    %782 = vst.msk [vmem:[#allocation2 + $0x1] sm:$0xff] %vm93, %v775
    %783 = vst.msk [vmem:[#allocation2 + $0x11] sm:$0xff] %vm93, %v776
    %v784 = vld [vmem:[#allocation2] sm:$0xff]
    %v785 = vld [vmem:[#allocation2 + $0x10] sm:$0xff]
    %v786 = vld [vmem:[%s9] sm:$0x1]
    %v787 = vlaneseq
    %v788 = vshrl.u32 %v787, 7
    %v789 = vsub.s32 0, %v788
    %v790 = vrot.slane %v786, %v789
    %v791 = vmul.f32 %v784, %v790
    %v792 = vmul.f32 %v785, %v790
    %v793 = vadd.f32 %v791, 0.0
    %v794 = vadd.f32 %v792, 0.0
    %v795 = vld [vmem:[%s11] sm:$0x1]
    %v796 = vlaneseq
    %v797 = vshrl.u32 %v796, 7
    %v798 = vsub.s32 0, %v797
    %v799 = vrot.slane %v795, %v798
    %v800 = vmul.f32 %v784, %v799
    %v801 = vmul.f32 %v785, %v799
    %v802 = vadd.f32 %v800, 0.0
    %v803 = vadd.f32 %v801, 0.0
    %v804 = vld [vmem:[%s13] sm:$0x1]
    %v805 = vlaneseq
    %v806 = vshrl.u32 %v805, 7
    %v807 = vsub.s32 0, %v806
    %v808 = vrot.slane %v804, %v807
    %v809 = vmul.f32 %v784, %v808
    %v810 = vmul.f32 %v785, %v808
    %v811 = vadd.f32 %v809, 0.0
    %v812 = vadd.f32 %v810, 0.0
    %v813 = vld [vmem:[#allocation2 + $0x1] sm:$0xff]
    %v814 = vld [vmem:[#allocation2 + $0x11] sm:$0xff]
    %v815 = vld [vmem:[%s9 + $0x1] sm:$0x1]
    %v816 = vlaneseq
    %v817 = vshrl.u32 %v816, 7
    %v818 = vsub.s32 0, %v817
    %v819 = vrot.slane %v815, %v818
    %v820 = vmul.f32 %v813, %v819
    %v821 = vmul.f32 %v814, %v819
    %v822 = vadd.f32 %v793, %v820
    %v823 = vadd.f32 %v794, %v821
    %v824 = vld [vmem:[%s11 + $0x1] sm:$0x1]
    %v825 = vlaneseq
    %v826 = vshrl.u32 %v825, 7
    %v827 = vsub.s32 0, %v826
    %v828 = vrot.slane %v824, %v827
    %v829 = vmul.f32 %v813, %v828
    %v830 = vmul.f32 %v814, %v828
    %v831 = vadd.f32 %v802, %v829
    %v832 = vadd.f32 %v803, %v830
    %v833 = vld [vmem:[%s13 + $0x1] sm:$0x1]
    %v834 = vlaneseq
    %v835 = vshrl.u32 %v834, 7
    %v836 = vsub.s32 0, %v835
    %v837 = vrot.slane %v833, %v836
    %v838 = vmul.f32 %v813, %v837
    %v839 = vmul.f32 %v814, %v837
    %v840 = vadd.f32 %v811, %v838
    %v841 = vadd.f32 %v812, %v839
    %v842 = vld [vmem:[#allocation2 + $0x2] sm:$0xff]
    %v843 = vld [vmem:[#allocation2 + $0x12] sm:$0xff]
    %v844 = vld [vmem:[%s9 + $0x2] sm:$0x1]
    %v845 = vlaneseq
    %v846 = vshrl.u32 %v845, 7
    %v847 = vsub.s32 0, %v846
    %v848 = vrot.slane %v844, %v847
    %v849 = vmul.f32 %v842, %v848
    %v850 = vmul.f32 %v843, %v848
    %v851 = vadd.f32 %v822, %v849
    %v852 = vadd.f32 %v823, %v850
    %v853 = vld [vmem:[%s11 + $0x2] sm:$0x1]
    %v854 = vlaneseq
    %v855 = vshrl.u32 %v854, 7
    %v856 = vsub.s32 0, %v855
    %v857 = vrot.slane %v853, %v856
    %v858 = vmul.f32 %v842, %v857
    %v859 = vmul.f32 %v843, %v857
    %v860 = vadd.f32 %v831, %v858
    %v861 = vadd.f32 %v832, %v859
    %v862 = vld [vmem:[%s13 + $0x2] sm:$0x1]
    %v863 = vlaneseq
    %v864 = vshrl.u32 %v863, 7
    %v865 = vsub.s32 0, %v864
    %v866 = vrot.slane %v862, %v865
    %v867 = vmul.f32 %v842, %v866
    %v868 = vmul.f32 %v843, %v866
    %v869 = vadd.f32 %v840, %v867
    %v870 = vadd.f32 %v841, %v868
    %v871 = vld [vmem:[%s10] sm:$0x1]
    %v873 = vlaneseq
    %v874 = vshrl.u32 %v873, 7
    %v875 = vsub.s32 0, %v874
    %v876 = vrot.slane %v871, %v875
    %v878 = vadd.f32 %v851, %v876
    %v879 = vadd.f32 %v852, %v876
    %vm880 = vcmp.ge.f32.partialorder %v878, 0.0
    %vm881 = vcmp.ge.f32.partialorder %v879, 0.0
    %v882 = vmul.f32 %v878, 0.2
    %v883 = vmul.f32 %v879, 0.2
    %v884 = vsel %vm880, %v878, %v882
    %v885 = vsel %vm881, %v879, %v883
    %v886 = vld [vmem:[%s12] sm:$0x1]
    %v888 = vlaneseq
    %v889 = vshrl.u32 %v888, 7
    %v890 = vsub.s32 0, %v889
    %v891 = vrot.slane %v886, %v890
    %v893 = vadd.f32 %v860, %v891
    %v894 = vadd.f32 %v861, %v891
    %vm895 = vcmp.ge.f32.partialorder %v893, 0.0
    %vm896 = vcmp.ge.f32.partialorder %v894, 0.0
    %v897 = vmul.f32 %v893, 0.2
    %v898 = vmul.f32 %v894, 0.2
    %v899 = vsel %vm895, %v893, %v897
    %v900 = vsel %vm896, %v894, %v898
    %v901 = vld [vmem:[%s14] sm:$0x1]
    %v903 = vlaneseq
    %v904 = vshrl.u32 %v903, 7
    %v905 = vsub.s32 0, %v904
    %v906 = vrot.slane %v901, %v905
    %v908 = vadd.f32 %v869, %v906
    %v909 = vadd.f32 %v870, %v906
    %vm910 = vcmp.ge.f32.partialorder %v908, 0.0
    %vm911 = vcmp.ge.f32.partialorder %v909, 0.0
    %v912 = vmul.f32 %v908, 0.2
    %v913 = vmul.f32 %v909, 0.2
    %v914 = vsel %vm910, %v908, %v912
    %v915 = vsel %vm911, %v909, %v913
    %v917 = vsel %vm93, %v884, 0
    %v920 = vsel %vm93, %v899, 0
    %922 = vmatprep.subr.mxu0 0.0
    %923 = vmatpush1.xpose.msra.mxu0 0.0
    %924 = vmatprep.subr.mxu0 0.0
    %925 = vmatpush1.xpose.msra.mxu0 0.0
    %926 = vmatprep.subr.mxu0 0.0
    %927 = vmatpush1.xpose.msra.mxu0 0.0
    %928 = vmatprep.subr.mxu0 0.0
    %929 = vmatpush1.xpose.msra.mxu0 0.0
    %930 = vmatprep.subr.mxu0 0.0
    %931 = vmatpush1.xpose.msra.mxu0 0.0
    %932 = vmatprep.subr.mxu0 0.0
    %933 = vmatpush1.xpose.msra.mxu0 0.0
    %934 = vmatprep.subr.mxu0 0.0
    %935 = vmatpush1.xpose.msra.mxu0 0.0
    %936 = vmatprep.subr.mxu0 0.0
    %937 = vmatpush1.xpose.msra.mxu0 0.0
    %938 = vmatprep.subr.mxu0 0.0
    %939 = vmatpush1.xpose.msra.mxu0 0.0
    %940 = vmatprep.subr.mxu0 0.0
    %941 = vmatpush1.xpose.msra.mxu0 0.0
    %942 = vmatprep.subr.mxu0 0.0
    %943 = vmatpush1.xpose.msra.mxu0 0.0
    %944 = vmatprep.subr.mxu0 0.0
    %945 = vmatpush1.xpose.msra.mxu0 0.0
    %946 = vmatprep.subr.mxu0 0.0
    %947 = vmatpush1.xpose.msra.mxu0 0.0
    %948 = vmatprep.subr.mxu0 0.0
    %949 = vmatpush1.xpose.msra.mxu0 0.0
    %950 = vmatprep.subr.mxu0 0.0
    %951 = vmatpush1.xpose.msra.mxu0 0.0
    %952 = vmatprep.subr.mxu0 0.0
    %953 = vmatpush1.xpose.msra.mxu0 %v920
    %954 = vmatprep.subr.mxu0 0.0
    %955 = vmatpush2.xpose.msra.mxu0 0.0
    %956 = vmatprep.subr.mxu0 0.0
    %957 = vmatpush2.xpose.msra.mxu0 0.0
    %958 = vmatprep.subr.mxu0 0.0
    %959 = vmatpush2.xpose.msra.mxu0 0.0
    %960 = vmatprep.subr.mxu0 0.0
    %961 = vmatpush2.xpose.msra.mxu0 0.0
    %962 = vmatprep.subr.mxu0 0.0
    %963 = vmatpush2.xpose.msra.mxu0 0.0
    %964 = vmatprep.subr.mxu0 0.0
    %965 = vmatpush2.xpose.msra.mxu0 0.0
    %966 = vmatprep.subr.mxu0 0.0
    %967 = vmatpush2.xpose.msra.mxu0 0.0
    %968 = vmatprep.subr.mxu0 0.0
    %969 = vmatpush2.xpose.msra.mxu0 0.0
    %970 = vmatprep.subr.mxu0 0.0
    %971 = vmatpush2.xpose.msra.mxu0 0.0
    %972 = vmatprep.subr.mxu0 0.0
    %973 = vmatpush2.xpose.msra.mxu0 0.0
    %974 = vmatprep.subr.mxu0 0.0
    %975 = vmatpush2.xpose.msra.mxu0 0.0
    %976 = vmatprep.subr.mxu0 0.0
    %977 = vmatpush2.xpose.msra.mxu0 0.0
    %978 = vmatprep.subr.mxu0 0.0
    %979 = vmatpush2.xpose.msra.mxu0 0.0
    %980 = vmatprep.subr.mxu0 0.0
    %981 = vmatpush2.xpose.msra.mxu0 0.0
    %982 = vmatprep.subr.mxu0 0.0
    %983 = vmatpush2.xpose.msra.mxu0 0.0
    %984 = vmatprep.subr.mxu0 0.0
    %985 = vmatpush2.xpose.msra.mxu0 0.0
    %986 = vmatprep.mubr.f32.mxu0 0.0
    %987 = vmatmul.mubr.f32.gmra.mxu0 %v917
    %v988 = vpop.f32.mrf.mxu0
    %v989 = vadd.f32 0.0, %v988
    %v990 = vpop.f32.mrf.mxu0
    %991 = vdwg.mxu0
    %v993 = vsel %vm93, %v885, 0
    %v996 = vsel %vm93, %v900, 0
    %998 = vmatprep.subr.mxu0 0.0
    %999 = vmatpush1.xpose.msra.mxu0 0.0
    %1000 = vmatprep.subr.mxu0 0.0
    %1001 = vmatpush1.xpose.msra.mxu0 0.0
    %1002 = vmatprep.subr.mxu0 0.0
    %1003 = vmatpush1.xpose.msra.mxu0 0.0
    %1004 = vmatprep.subr.mxu0 0.0
    %1005 = vmatpush1.xpose.msra.mxu0 0.0
    %1006 = vmatprep.subr.mxu0 0.0
    %1007 = vmatpush1.xpose.msra.mxu0 0.0
    %1008 = vmatprep.subr.mxu0 0.0
    %1009 = vmatpush1.xpose.msra.mxu0 0.0
    %1010 = vmatprep.subr.mxu0 0.0
    %1011 = vmatpush1.xpose.msra.mxu0 0.0
    %1012 = vmatprep.subr.mxu0 0.0
    %1013 = vmatpush1.xpose.msra.mxu0 0.0
    %1014 = vmatprep.subr.mxu0 0.0
    %1015 = vmatpush1.xpose.msra.mxu0 0.0
    %1016 = vmatprep.subr.mxu0 0.0
    %1017 = vmatpush1.xpose.msra.mxu0 0.0
    %1018 = vmatprep.subr.mxu0 0.0
    %1019 = vmatpush1.xpose.msra.mxu0 0.0
    %1020 = vmatprep.subr.mxu0 0.0
    %1021 = vmatpush1.xpose.msra.mxu0 0.0
    %1022 = vmatprep.subr.mxu0 0.0
    %1023 = vmatpush1.xpose.msra.mxu0 0.0
    %1024 = vmatprep.subr.mxu0 0.0
    %1025 = vmatpush1.xpose.msra.mxu0 0.0
    %1026 = vmatprep.subr.mxu0 0.0
    %1027 = vmatpush1.xpose.msra.mxu0 0.0
    %1028 = vmatprep.subr.mxu0 0.0
    %1029 = vmatpush1.xpose.msra.mxu0 %v996
    %1030 = vmatprep.subr.mxu0 0.0
    %1031 = vmatpush2.xpose.msra.mxu0 0.0
    %1032 = vmatprep.subr.mxu0 0.0
    %1033 = vmatpush2.xpose.msra.mxu0 0.0
    %1034 = vmatprep.subr.mxu0 0.0
    %1035 = vmatpush2.xpose.msra.mxu0 0.0
    %1036 = vmatprep.subr.mxu0 0.0
    %1037 = vmatpush2.xpose.msra.mxu0 0.0
    %1038 = vmatprep.subr.mxu0 0.0
    %1039 = vmatpush2.xpose.msra.mxu0 0.0
    %1040 = vmatprep.subr.mxu0 0.0
    %1041 = vmatpush2.xpose.msra.mxu0 0.0
    %1042 = vmatprep.subr.mxu0 0.0
    %1043 = vmatpush2.xpose.msra.mxu0 0.0
    %1044 = vmatprep.subr.mxu0 0.0
    %1045 = vmatpush2.xpose.msra.mxu0 0.0
    %1046 = vmatprep.subr.mxu0 0.0
    %1047 = vmatpush2.xpose.msra.mxu0 0.0
    %1048 = vmatprep.subr.mxu0 0.0
    %1049 = vmatpush2.xpose.msra.mxu0 0.0
    %1050 = vmatprep.subr.mxu0 0.0
    %1051 = vmatpush2.xpose.msra.mxu0 0.0
    %1052 = vmatprep.subr.mxu0 0.0
    %1053 = vmatpush2.xpose.msra.mxu0 0.0
    %1054 = vmatprep.subr.mxu0 0.0
    %1055 = vmatpush2.xpose.msra.mxu0 0.0
    %1056 = vmatprep.subr.mxu0 0.0
    %1057 = vmatpush2.xpose.msra.mxu0 0.0
    %1058 = vmatprep.subr.mxu0 0.0
    %1059 = vmatpush2.xpose.msra.mxu0 0.0
    %1060 = vmatprep.subr.mxu0 0.0
    %1061 = vmatpush2.xpose.msra.mxu0 0.0
    %1062 = vmatprep.mubr.f32.mxu0 0.0
    %1063 = vmatmul.mubr.f32.gmra.mxu0 %v993
    %v1064 = vpop.f32.mrf.mxu0
    %v1065 = vadd.f32 0.0, %v1064
    %v1066 = vpop.f32.mrf.mxu0
    %1067 = vdwg.mxu0
    %v1068 = vmul.f32 %v989, 0.35355338
    %v1069 = vmul.f32 %v1065, 0.35355338
    %v1070 = vld [vmem:[%s5] sm:$0xff]
    %v1071 = vld [vmem:[%s5 + $0x8] sm:$0xff]
    %vm1072 = vcmp.eq.f32.partialorder %v1070, 0.0
    %vm1073 = vcmp.eq.f32.partialorder %v1071, 0.0
    %v1074 = vsel %vm1072, -9e+15, %v1068
    %v1075 = vsel %vm1073, -9e+15, %v1069
    %v1076 = vsel %vm444, %v1074, -inf
    %1077 = vmax.xlane.f32.xlu0 %v1076
    %v1078 = vpop.xlane.xlu0 %1077
    %v1079 = vsel %vm444, %v1075, -inf
    %1080 = vmax.xlane.f32.xlu0 %v1079
    %v1081 = vpop.xlane.xlu0 %1080
    %v1082 = vsub.f32 %v1074, %v1078
    %v1083 = vsub.f32 %v1075, %v1081
    %v1084 = vmul.f32 %v1082, 1.442695
    %v1085 = vpow.pop %v1084
    %v1086 = vmul.f32 %v1083, 1.442695
    %v1087 = vpow.pop %v1086
    %v1088 = vsel %vm444, %v1085, 0.0
    %1089 = vadd.xlane.f32.xlu0 %v1088
    %v1090 = vpop.xlane.xlu0 %1089
    %v1091 = vsel %vm444, %v1087, 0.0
    %1092 = vadd.xlane.f32.xlu0 %v1091
    %v1093 = vpop.xlane.xlu0 %1092
    %v1094 = vrcp.pop %v1090
    %v1095 = vmul.f32 %v1085, %v1094
    %v1096 = vrcp.pop %v1093
    %v1097 = vmul.f32 %v1087, %v1096
    %v1099 = vsel %vm444, %v1095, 0
    %1101 = vmatprep.subr.mxu0 0.0
    %1102 = vmatpush1.msra.mxu0 0.0
    %1103 = vmatprep.subr.mxu0 0.0
    %1104 = vmatpush1.msra.mxu0 0.0
    %1105 = vmatprep.subr.mxu0 0.0
    %1106 = vmatpush1.msra.mxu0 0.0
    %1107 = vmatprep.subr.mxu0 0.0
    %1108 = vmatpush1.msra.mxu0 0.0
    %1109 = vmatprep.subr.mxu0 0.0
    %1110 = vmatpush1.msra.mxu0 0.0
    %1111 = vmatprep.subr.mxu0 0.0
    %1112 = vmatpush1.msra.mxu0 0.0
    %1113 = vmatprep.subr.mxu0 0.0
    %1114 = vmatpush1.msra.mxu0 0.0
    %1115 = vmatprep.subr.mxu0 0.0
    %1116 = vmatpush1.msra.mxu0 0.0
    %1117 = vmatprep.subr.mxu0 0.0
    %1118 = vmatpush1.msra.mxu0 0.0
    %1119 = vmatprep.subr.mxu0 0.0
    %1120 = vmatpush1.msra.mxu0 0.0
    %1121 = vmatprep.subr.mxu0 0.0
    %1122 = vmatpush1.msra.mxu0 0.0
    %1123 = vmatprep.subr.mxu0 0.0
    %1124 = vmatpush1.msra.mxu0 0.0
    %1125 = vmatprep.subr.mxu0 0.0
    %1126 = vmatpush1.msra.mxu0 0.0
    %1127 = vmatprep.subr.mxu0 0.0
    %1128 = vmatpush1.msra.mxu0 0.0
    %1129 = vmatprep.subr.mxu0 0.0
    %1130 = vmatpush1.msra.mxu0 0.0
    %1131 = vmatprep.subr.mxu0 0.0
    %1132 = vmatpush1.msra.mxu0 %v914
    %1133 = vmatprep.subr.mxu0 0.0
    %1134 = vmatpush2.msra.mxu0 0.0
    %1135 = vmatprep.subr.mxu0 0.0
    %1136 = vmatpush2.msra.mxu0 0.0
    %1137 = vmatprep.subr.mxu0 0.0
    %1138 = vmatpush2.msra.mxu0 0.0
    %1139 = vmatprep.subr.mxu0 0.0
    %1140 = vmatpush2.msra.mxu0 0.0
    %1141 = vmatprep.subr.mxu0 0.0
    %1142 = vmatpush2.msra.mxu0 0.0
    %1143 = vmatprep.subr.mxu0 0.0
    %1144 = vmatpush2.msra.mxu0 0.0
    %1145 = vmatprep.subr.mxu0 0.0
    %1146 = vmatpush2.msra.mxu0 0.0
    %1147 = vmatprep.subr.mxu0 0.0
    %1148 = vmatpush2.msra.mxu0 0.0
    %1149 = vmatprep.subr.mxu0 0.0
    %1150 = vmatpush2.msra.mxu0 0.0
    %1151 = vmatprep.subr.mxu0 0.0
    %1152 = vmatpush2.msra.mxu0 0.0
    %1153 = vmatprep.subr.mxu0 0.0
    %1154 = vmatpush2.msra.mxu0 0.0
    %1155 = vmatprep.subr.mxu0 0.0
    %1156 = vmatpush2.msra.mxu0 0.0
    %1157 = vmatprep.subr.mxu0 0.0
    %1158 = vmatpush2.msra.mxu0 0.0
    %1159 = vmatprep.subr.mxu0 0.0
    %1160 = vmatpush2.msra.mxu0 0.0
    %1161 = vmatprep.subr.mxu0 0.0
    %1162 = vmatpush2.msra.mxu0 0.0
    %1163 = vmatprep.subr.mxu0 0.0
    %1164 = vmatpush2.msra.mxu0 0.0
    %1165 = vmatprep.mubr.f32.mxu0 0.0
    %1166 = vmatmul.mubr.f32.gmra.mxu0 %v1099
    %v1167 = vpop.f32.mrf.mxu0
    %v1168 = vadd.f32 0.0, %v1167
    %v1169 = vpop.f32.mrf.mxu0
    %1170 = vdwg.mxu0
    %v1172 = vsel %vm444, %v1097, 0
    %1174 = vmatprep.subr.mxu0 0.0
    %1175 = vmatpush1.msra.mxu0 0.0
    %1176 = vmatprep.subr.mxu0 0.0
    %1177 = vmatpush1.msra.mxu0 0.0
    %1178 = vmatprep.subr.mxu0 0.0
    %1179 = vmatpush1.msra.mxu0 0.0
    %1180 = vmatprep.subr.mxu0 0.0
    %1181 = vmatpush1.msra.mxu0 0.0
    %1182 = vmatprep.subr.mxu0 0.0
    %1183 = vmatpush1.msra.mxu0 0.0
    %1184 = vmatprep.subr.mxu0 0.0
    %1185 = vmatpush1.msra.mxu0 0.0
    %1186 = vmatprep.subr.mxu0 0.0
    %1187 = vmatpush1.msra.mxu0 0.0
    %1188 = vmatprep.subr.mxu0 0.0
    %1189 = vmatpush1.msra.mxu0 0.0
    %1190 = vmatprep.subr.mxu0 0.0
    %1191 = vmatpush1.msra.mxu0 0.0
    %1192 = vmatprep.subr.mxu0 0.0
    %1193 = vmatpush1.msra.mxu0 0.0
    %1194 = vmatprep.subr.mxu0 0.0
    %1195 = vmatpush1.msra.mxu0 0.0
    %1196 = vmatprep.subr.mxu0 0.0
    %1197 = vmatpush1.msra.mxu0 0.0
    %1198 = vmatprep.subr.mxu0 0.0
    %1199 = vmatpush1.msra.mxu0 0.0
    %1200 = vmatprep.subr.mxu0 0.0
    %1201 = vmatpush1.msra.mxu0 0.0
    %1202 = vmatprep.subr.mxu0 0.0
    %1203 = vmatpush1.msra.mxu0 0.0
    %1204 = vmatprep.subr.mxu0 0.0
    %1205 = vmatpush1.msra.mxu0 %v915
    %1206 = vmatprep.subr.mxu0 0.0
    %1207 = vmatpush2.msra.mxu0 0.0
    %1208 = vmatprep.subr.mxu0 0.0
    %1209 = vmatpush2.msra.mxu0 0.0
    %1210 = vmatprep.subr.mxu0 0.0
    %1211 = vmatpush2.msra.mxu0 0.0
    %1212 = vmatprep.subr.mxu0 0.0
    %1213 = vmatpush2.msra.mxu0 0.0
    %1214 = vmatprep.subr.mxu0 0.0
    %1215 = vmatpush2.msra.mxu0 0.0
    %1216 = vmatprep.subr.mxu0 0.0
    %1217 = vmatpush2.msra.mxu0 0.0
    %1218 = vmatprep.subr.mxu0 0.0
    %1219 = vmatpush2.msra.mxu0 0.0
    %1220 = vmatprep.subr.mxu0 0.0
    %1221 = vmatpush2.msra.mxu0 0.0
    %1222 = vmatprep.subr.mxu0 0.0
    %1223 = vmatpush2.msra.mxu0 0.0
    %1224 = vmatprep.subr.mxu0 0.0
    %1225 = vmatpush2.msra.mxu0 0.0
    %1226 = vmatprep.subr.mxu0 0.0
    %1227 = vmatpush2.msra.mxu0 0.0
    %1228 = vmatprep.subr.mxu0 0.0
    %1229 = vmatpush2.msra.mxu0 0.0
    %1230 = vmatprep.subr.mxu0 0.0
    %1231 = vmatpush2.msra.mxu0 0.0
    %1232 = vmatprep.subr.mxu0 0.0
    %1233 = vmatpush2.msra.mxu0 0.0
    %1234 = vmatprep.subr.mxu0 0.0
    %1235 = vmatpush2.msra.mxu0 0.0
    %1236 = vmatprep.subr.mxu0 0.0
    %1237 = vmatpush2.msra.mxu0 0.0
    %1238 = vmatprep.mubr.f32.mxu0 0.0
    %1239 = vmatmul.mubr.f32.gmra.mxu0 %v1172
    %v1240 = vpop.f32.mrf.mxu0
    %v1241 = vadd.f32 0.0, %v1240
    %v1242 = vpop.f32.mrf.mxu0
    %1243 = vdwg.mxu0
    %v1244 = vadd.f32 %v699, %v1168
    %v1245 = vadd.f32 %v772, %v1241
    %v1246 = vld [vmem:[%s6] sm:$0xff]
    %v1247 = vld [vmem:[%s6 + $0x8] sm:$0xff]
    %vm1248 = vcmask 7168
    %v1249 = vsel %vm1248, %v1246, 0.0
    %v1250 = vrot.slane %v1249, 4
    %v1251 = vadd.f32 %v1249, %v1250
    %v1252 = vrot.slane %v1251, 2
    %v1253 = vadd.f32 %v1251, %v1252
    %v1254 = vrot.slane %v1253, 1
    %v1255 = vadd.f32 %v1253, %v1254
    %v1256 = vsel %vm1248, %v1247, 0.0
    %v1257 = vrot.slane %v1256, 4
    %v1258 = vadd.f32 %v1256, %v1257
    %v1259 = vrot.slane %v1258, 2
    %v1260 = vadd.f32 %v1258, %v1259
    %v1261 = vrot.slane %v1260, 1
    %v1262 = vadd.f32 %v1260, %v1261
    %v1263 = vcvt.f32.s32.to.zero.pseudo %v1255
    %v1264 = vcvt.f32.s32.to.zero.pseudo %v1262
    %v1265 = vsub.s32 %v1263, 1
    %v1266 = vsub.s32 %v1264, 1
    %v1267 = vlaneseq
    %v1268 = vshrl.u32 %v1267, 7
    %vm1269 = vcmp.eq.s32.totalorder %v1268, %v1265
    %vm1270 = vcmp.eq.s32.totalorder %v1268, %v1266
    %v1271 = vsel %vm1269, 1, 0
    %v1272 = vsel %vm1270, 1, 0
    %v1273 = vcvt.s32.f32 %v1271
    %v1274 = vcvt.s32.f32 %v1272
    %1276 = vset.pattern.permute.xlu0 0
    %1277 = vperm.xlu0 %1276, %v1273
    %v1278 = vpop.permute.xlu0 %1277
    %1281 = vset.pattern.permute.xlu0 0
    %1282 = vperm.xlu0 %1281, %v1274
    %v1283 = vpop.permute.xlu0 %1282
    %v1285 = vmul.f32 %v1244, %v1278
    %v1286 = vmul.f32 %v1245, %v1283
    %v1287 = vsel %vm93, %v1285, 0.0
    %v1288 = vrot.slane %v1287, 4
    %v1289 = vadd.f32 %v1287, %v1288
    %v1290 = vrot.slane %v1289, 2
    %v1291 = vadd.f32 %v1289, %v1290
    %v1292 = vrot.slane %v1291, 1
    %v1293 = vadd.f32 %v1291, %v1292
    %v1294 = vsel %vm93, %v1286, 0.0
    %v1295 = vrot.slane %v1294, 4
    %v1296 = vadd.f32 %v1294, %v1295
    %v1297 = vrot.slane %v1296, 2
    %v1298 = vadd.f32 %v1296, %v1297
    %v1299 = vrot.slane %v1298, 1
    %v1300 = vadd.f32 %v1298, %v1299
    %1302 = vset.pattern.permute.xlu0 0
    %1303 = vperm.xlu0 %1302, %v1246
    %v1304 = vpop.permute.xlu0 %1303
    %1307 = vset.pattern.permute.xlu0 0
    %1308 = vperm.xlu0 %1307, %v1247
    %v1309 = vpop.permute.xlu0 %1308
    %v1311 = vmul.f32 %v1244, %v1304
    %v1312 = vmul.f32 %v1245, %v1309
    %v1313 = vsel %vm93, %v1311, 0.0
    %v1314 = vrot.slane %v1313, 4
    %v1315 = vadd.f32 %v1313, %v1314
    %v1316 = vrot.slane %v1315, 2
    %v1317 = vadd.f32 %v1315, %v1316
    %v1318 = vrot.slane %v1317, 1
    %v1319 = vadd.f32 %v1317, %v1318
    %v1320 = vsel %vm93, %v1312, 0.0
    %v1321 = vrot.slane %v1320, 4
    %v1322 = vadd.f32 %v1320, %v1321
    %v1323 = vrot.slane %v1322, 2
    %v1324 = vadd.f32 %v1322, %v1323
    %v1325 = vrot.slane %v1324, 1
    %v1326 = vadd.f32 %v1324, %v1325
    %1328 = vset.pattern.permute.xlu0 0
    %1329 = vperm.xlu0 %1328, %v1255
    %v1330 = vpop.permute.xlu0 %1329
    %1333 = vset.pattern.permute.xlu0 0
    %1334 = vperm.xlu0 %1333, %v1262
    %v1335 = vpop.permute.xlu0 %1334
    %v1337 = vrcp.pop %v1330
    %v1338 = vmul.f32 %v1319, %v1337
    %v1339 = vrcp.pop %v1335
    %v1340 = vmul.f32 %v1326, %v1339
    %v1341 = vld [vmem:[%s15] sm:$0xff]
    %v1342 = vld [vmem:[%s15 + $0x8] sm:$0xff]
    %v1343 = vld [vmem:[%s15 + $0x10] sm:$0xff]
    %v1344 = vld [vmem:[%s15 + $0x18] sm:$0xff]
    %v1345 = vld [vmem:[%s17] sm:$0xff]
    %v1346 = vld [vmem:[%s17 + $0x8] sm:$0xff]
    %v1347 = vld [vmem:[%s17 + $0x10] sm:$0xff]
    %v1348 = vld [vmem:[%s17 + $0x18] sm:$0xff]
    %v1349 = vld [vmem:[%s18] sm:$0xff]
    %v1350 = vld [vmem:[%s18 + $0x8] sm:$0xff]
    %v1351 = vld [vmem:[%s18 + $0x10] sm:$0xff]
    %v1352 = vld [vmem:[%s18 + $0x18] sm:$0xff]
    %v1353 = vld [vmem:[%s19] sm:$0xff]
    %v1354 = vld [vmem:[%s19 + $0x8] sm:$0xff]
    %v1355 = vld [vmem:[%s19 + $0x10] sm:$0xff]
    %v1356 = vld [vmem:[%s19 + $0x18] sm:$0xff]
    %v1358 = vsel %vm93, %v1293, 0
    %1360 = vmatprep.subr.mxu0 0.0
    %1361 = vmatpush1.msra.mxu0 0.0
    %1362 = vmatprep.subr.mxu0 0.0
    %1363 = vmatpush1.msra.mxu0 0.0
    %1364 = vmatprep.subr.mxu0 0.0
    %1365 = vmatpush1.msra.mxu0 0.0
    %1366 = vmatprep.subr.mxu0 0.0
    %1367 = vmatpush1.msra.mxu0 0.0
    %1368 = vmatprep.subr.mxu0 0.0
    %1369 = vmatpush1.msra.mxu0 0.0
    %1370 = vmatprep.subr.mxu0 0.0
    %1371 = vmatpush1.msra.mxu0 0.0
    %1372 = vmatprep.subr.mxu0 0.0
    %1373 = vmatpush1.msra.mxu0 0.0
    %1374 = vmatprep.subr.mxu0 0.0
    %1375 = vmatpush1.msra.mxu0 0.0
    %1376 = vmatprep.subr.mxu0 0.0
    %1377 = vmatpush1.msra.mxu0 0.0
    %1378 = vmatprep.subr.mxu0 0.0
    %1379 = vmatpush1.msra.mxu0 0.0
    %1380 = vmatprep.subr.mxu0 0.0
    %1381 = vmatpush1.msra.mxu0 0.0
    %1382 = vmatprep.subr.mxu0 0.0
    %1383 = vmatpush1.msra.mxu0 0.0
    %1384 = vmatprep.subr.mxu0 0.0
    %1385 = vmatpush1.msra.mxu0 %v1352
    %1386 = vmatprep.subr.mxu0 0.0
    %1387 = vmatpush1.msra.mxu0 %v1351
    %1388 = vmatprep.subr.mxu0 0.0
    %1389 = vmatpush1.msra.mxu0 %v1350
    %1390 = vmatprep.subr.mxu0 0.0
    %1391 = vmatpush1.msra.mxu0 %v1349
    %1392 = vmatprep.subr.mxu0 0.0
    %1393 = vmatpush2.msra.mxu0 0.0
    %1394 = vmatprep.subr.mxu0 0.0
    %1395 = vmatpush2.msra.mxu0 0.0
    %1396 = vmatprep.subr.mxu0 0.0
    %1397 = vmatpush2.msra.mxu0 0.0
    %1398 = vmatprep.subr.mxu0 0.0
    %1399 = vmatpush2.msra.mxu0 0.0
    %1400 = vmatprep.subr.mxu0 0.0
    %1401 = vmatpush2.msra.mxu0 0.0
    %1402 = vmatprep.subr.mxu0 0.0
    %1403 = vmatpush2.msra.mxu0 0.0
    %1404 = vmatprep.subr.mxu0 0.0
    %1405 = vmatpush2.msra.mxu0 0.0
    %1406 = vmatprep.subr.mxu0 0.0
    %1407 = vmatpush2.msra.mxu0 0.0
    %1408 = vmatprep.subr.mxu0 0.0
    %1409 = vmatpush2.msra.mxu0 0.0
    %1410 = vmatprep.subr.mxu0 0.0
    %1411 = vmatpush2.msra.mxu0 0.0
    %1412 = vmatprep.subr.mxu0 0.0
    %1413 = vmatpush2.msra.mxu0 0.0
    %1414 = vmatprep.subr.mxu0 0.0
    %1415 = vmatpush2.msra.mxu0 0.0
    %1416 = vmatprep.subr.mxu0 0.0
    %1417 = vmatpush2.msra.mxu0 0.0
    %1418 = vmatprep.subr.mxu0 0.0
    %1419 = vmatpush2.msra.mxu0 0.0
    %1420 = vmatprep.subr.mxu0 0.0
    %1421 = vmatpush2.msra.mxu0 0.0
    %1422 = vmatprep.subr.mxu0 0.0
    %1423 = vmatpush2.msra.mxu0 0.0
    %1424 = vmatprep.mubr.f32.mxu0 0.0
    %1425 = vmatmul.mubr.f32.gmra.mxu0 %v1358
    %v1426 = vpop.f32.mrf.mxu0
    %v1427 = vadd.f32 0.0, %v1426
    %v1428 = vpop.f32.mrf.mxu0
    %1429 = vdwg.mxu0
    %v1431 = vsel %vm93, %v1300, 0
    %1433 = vmatprep.subr.mxu0 0.0
    %1434 = vmatpush1.msra.mxu0 0.0
    %1435 = vmatprep.subr.mxu0 0.0
    %1436 = vmatpush1.msra.mxu0 0.0
    %1437 = vmatprep.subr.mxu0 0.0
    %1438 = vmatpush1.msra.mxu0 0.0
    %1439 = vmatprep.subr.mxu0 0.0
    %1440 = vmatpush1.msra.mxu0 0.0
    %1441 = vmatprep.subr.mxu0 0.0
    %1442 = vmatpush1.msra.mxu0 0.0
    %1443 = vmatprep.subr.mxu0 0.0
    %1444 = vmatpush1.msra.mxu0 0.0
    %1445 = vmatprep.subr.mxu0 0.0
    %1446 = vmatpush1.msra.mxu0 0.0
    %1447 = vmatprep.subr.mxu0 0.0
    %1448 = vmatpush1.msra.mxu0 0.0
    %1449 = vmatprep.subr.mxu0 0.0
    %1450 = vmatpush1.msra.mxu0 0.0
    %1451 = vmatprep.subr.mxu0 0.0
    %1452 = vmatpush1.msra.mxu0 0.0
    %1453 = vmatprep.subr.mxu0 0.0
    %1454 = vmatpush1.msra.mxu0 0.0
    %1455 = vmatprep.subr.mxu0 0.0
    %1456 = vmatpush1.msra.mxu0 0.0
    %1457 = vmatprep.subr.mxu0 0.0
    %1458 = vmatpush1.msra.mxu0 %v1352
    %1459 = vmatprep.subr.mxu0 0.0
    %1460 = vmatpush1.msra.mxu0 %v1351
    %1461 = vmatprep.subr.mxu0 0.0
    %1462 = vmatpush1.msra.mxu0 %v1350
    %1463 = vmatprep.subr.mxu0 0.0
    %1464 = vmatpush1.msra.mxu0 %v1349
    %1465 = vmatprep.subr.mxu0 0.0
    %1466 = vmatpush2.msra.mxu0 0.0
    %1467 = vmatprep.subr.mxu0 0.0
    %1468 = vmatpush2.msra.mxu0 0.0
    %1469 = vmatprep.subr.mxu0 0.0
    %1470 = vmatpush2.msra.mxu0 0.0
    %1471 = vmatprep.subr.mxu0 0.0
    %1472 = vmatpush2.msra.mxu0 0.0
    %1473 = vmatprep.subr.mxu0 0.0
    %1474 = vmatpush2.msra.mxu0 0.0
    %1475 = vmatprep.subr.mxu0 0.0
    %1476 = vmatpush2.msra.mxu0 0.0
    %1477 = vmatprep.subr.mxu0 0.0
    %1478 = vmatpush2.msra.mxu0 0.0
    %1479 = vmatprep.subr.mxu0 0.0
    %1480 = vmatpush2.msra.mxu0 0.0
    %1481 = vmatprep.subr.mxu0 0.0
    %1482 = vmatpush2.msra.mxu0 0.0
    %1483 = vmatprep.subr.mxu0 0.0
    %1484 = vmatpush2.msra.mxu0 0.0
    %1485 = vmatprep.subr.mxu0 0.0
    %1486 = vmatpush2.msra.mxu0 0.0
    %1487 = vmatprep.subr.mxu0 0.0
    %1488 = vmatpush2.msra.mxu0 0.0
    %1489 = vmatprep.subr.mxu0 0.0
    %1490 = vmatpush2.msra.mxu0 0.0
    %1491 = vmatprep.subr.mxu0 0.0
    %1492 = vmatpush2.msra.mxu0 0.0
    %1493 = vmatprep.subr.mxu0 0.0
    %1494 = vmatpush2.msra.mxu0 0.0
    %1495 = vmatprep.subr.mxu0 0.0
    %1496 = vmatpush2.msra.mxu0 0.0
    %1497 = vmatprep.mubr.f32.mxu0 0.0
    %1498 = vmatmul.mubr.f32.gmra.mxu0 %v1431
    %v1499 = vpop.f32.mrf.mxu0
    %v1500 = vadd.f32 0.0, %v1499
    %v1501 = vpop.f32.mrf.mxu0
    %1502 = vdwg.mxu0
    %v1504 = vsel %vm93, %v1338, 0
    %1506 = vmatprep.subr.mxu0 0.0
    %1507 = vmatpush1.msra.mxu0 0.0
    %1508 = vmatprep.subr.mxu0 0.0
    %1509 = vmatpush1.msra.mxu0 0.0
    %1510 = vmatprep.subr.mxu0 0.0
    %1511 = vmatpush1.msra.mxu0 0.0
    %1512 = vmatprep.subr.mxu0 0.0
    %1513 = vmatpush1.msra.mxu0 0.0
    %1514 = vmatprep.subr.mxu0 0.0
    %1515 = vmatpush1.msra.mxu0 0.0
    %1516 = vmatprep.subr.mxu0 0.0
    %1517 = vmatpush1.msra.mxu0 0.0
    %1518 = vmatprep.subr.mxu0 0.0
    %1519 = vmatpush1.msra.mxu0 0.0
    %1520 = vmatprep.subr.mxu0 0.0
    %1521 = vmatpush1.msra.mxu0 0.0
    %1522 = vmatprep.subr.mxu0 0.0
    %1523 = vmatpush1.msra.mxu0 0.0
    %1524 = vmatprep.subr.mxu0 0.0
    %1525 = vmatpush1.msra.mxu0 0.0
    %1526 = vmatprep.subr.mxu0 0.0
    %1527 = vmatpush1.msra.mxu0 0.0
    %1528 = vmatprep.subr.mxu0 0.0
    %1529 = vmatpush1.msra.mxu0 0.0
    %1530 = vmatprep.subr.mxu0 0.0
    %1531 = vmatpush1.msra.mxu0 %v1348
    %1532 = vmatprep.subr.mxu0 0.0
    %1533 = vmatpush1.msra.mxu0 %v1347
    %1534 = vmatprep.subr.mxu0 0.0
    %1535 = vmatpush1.msra.mxu0 %v1346
    %1536 = vmatprep.subr.mxu0 0.0
    %1537 = vmatpush1.msra.mxu0 %v1345
    %1538 = vmatprep.subr.mxu0 0.0
    %1539 = vmatpush2.msra.mxu0 0.0
    %1540 = vmatprep.subr.mxu0 0.0
    %1541 = vmatpush2.msra.mxu0 0.0
    %1542 = vmatprep.subr.mxu0 0.0
    %1543 = vmatpush2.msra.mxu0 0.0
    %1544 = vmatprep.subr.mxu0 0.0
    %1545 = vmatpush2.msra.mxu0 0.0
    %1546 = vmatprep.subr.mxu0 0.0
    %1547 = vmatpush2.msra.mxu0 0.0
    %1548 = vmatprep.subr.mxu0 0.0
    %1549 = vmatpush2.msra.mxu0 0.0
    %1550 = vmatprep.subr.mxu0 0.0
    %1551 = vmatpush2.msra.mxu0 0.0
    %1552 = vmatprep.subr.mxu0 0.0
    %1553 = vmatpush2.msra.mxu0 0.0
    %1554 = vmatprep.subr.mxu0 0.0
    %1555 = vmatpush2.msra.mxu0 0.0
    %1556 = vmatprep.subr.mxu0 0.0
    %1557 = vmatpush2.msra.mxu0 0.0
    %1558 = vmatprep.subr.mxu0 0.0
    %1559 = vmatpush2.msra.mxu0 0.0
    %1560 = vmatprep.subr.mxu0 0.0
    %1561 = vmatpush2.msra.mxu0 0.0
    %1562 = vmatprep.subr.mxu0 0.0
    %1563 = vmatpush2.msra.mxu0 0.0
    %1564 = vmatprep.subr.mxu0 0.0
    %1565 = vmatpush2.msra.mxu0 0.0
    %1566 = vmatprep.subr.mxu0 0.0
    %1567 = vmatpush2.msra.mxu0 0.0
    %1568 = vmatprep.subr.mxu0 0.0
    %1569 = vmatpush2.msra.mxu0 0.0
    %1570 = vmatprep.mubr.f32.mxu0 0.0
    %1571 = vmatmul.mubr.f32.gmra.mxu0 %v1504
    %v1572 = vpop.f32.mrf.mxu0
    %v1573 = vadd.f32 %v1427, %v1572
    %v1574 = vpop.f32.mrf.mxu0
    %1575 = vdwg.mxu0
    %v1577 = vsel %vm93, %v1340, 0
    %1579 = vmatprep.subr.mxu0 0.0
    %1580 = vmatpush1.msra.mxu0 0.0
    %1581 = vmatprep.subr.mxu0 0.0
    %1582 = vmatpush1.msra.mxu0 0.0
    %1583 = vmatprep.subr.mxu0 0.0
    %1584 = vmatpush1.msra.mxu0 0.0
    %1585 = vmatprep.subr.mxu0 0.0
    %1586 = vmatpush1.msra.mxu0 0.0
    %1587 = vmatprep.subr.mxu0 0.0
    %1588 = vmatpush1.msra.mxu0 0.0
    %1589 = vmatprep.subr.mxu0 0.0
    %1590 = vmatpush1.msra.mxu0 0.0
    %1591 = vmatprep.subr.mxu0 0.0
    %1592 = vmatpush1.msra.mxu0 0.0
    %1593 = vmatprep.subr.mxu0 0.0
    %1594 = vmatpush1.msra.mxu0 0.0
    %1595 = vmatprep.subr.mxu0 0.0
    %1596 = vmatpush1.msra.mxu0 0.0
    %1597 = vmatprep.subr.mxu0 0.0
    %1598 = vmatpush1.msra.mxu0 0.0
    %1599 = vmatprep.subr.mxu0 0.0
    %1600 = vmatpush1.msra.mxu0 0.0
    %1601 = vmatprep.subr.mxu0 0.0
    %1602 = vmatpush1.msra.mxu0 0.0
    %1603 = vmatprep.subr.mxu0 0.0
    %1604 = vmatpush1.msra.mxu0 %v1348
    %1605 = vmatprep.subr.mxu0 0.0
    %1606 = vmatpush1.msra.mxu0 %v1347
    %1607 = vmatprep.subr.mxu0 0.0
    %1608 = vmatpush1.msra.mxu0 %v1346
    %1609 = vmatprep.subr.mxu0 0.0
    %1610 = vmatpush1.msra.mxu0 %v1345
    %1611 = vmatprep.subr.mxu0 0.0
    %1612 = vmatpush2.msra.mxu0 0.0
    %1613 = vmatprep.subr.mxu0 0.0
    %1614 = vmatpush2.msra.mxu0 0.0
    %1615 = vmatprep.subr.mxu0 0.0
    %1616 = vmatpush2.msra.mxu0 0.0
    %1617 = vmatprep.subr.mxu0 0.0
    %1618 = vmatpush2.msra.mxu0 0.0
    %1619 = vmatprep.subr.mxu0 0.0
    %1620 = vmatpush2.msra.mxu0 0.0
    %1621 = vmatprep.subr.mxu0 0.0
    %1622 = vmatpush2.msra.mxu0 0.0
    %1623 = vmatprep.subr.mxu0 0.0
    %1624 = vmatpush2.msra.mxu0 0.0
    %1625 = vmatprep.subr.mxu0 0.0
    %1626 = vmatpush2.msra.mxu0 0.0
    %1627 = vmatprep.subr.mxu0 0.0
    %1628 = vmatpush2.msra.mxu0 0.0
    %1629 = vmatprep.subr.mxu0 0.0
    %1630 = vmatpush2.msra.mxu0 0.0
    %1631 = vmatprep.subr.mxu0 0.0
    %1632 = vmatpush2.msra.mxu0 0.0
    %1633 = vmatprep.subr.mxu0 0.0
    %1634 = vmatpush2.msra.mxu0 0.0
    %1635 = vmatprep.subr.mxu0 0.0
    %1636 = vmatpush2.msra.mxu0 0.0
    %1637 = vmatprep.subr.mxu0 0.0
    %1638 = vmatpush2.msra.mxu0 0.0
    %1639 = vmatprep.subr.mxu0 0.0
    %1640 = vmatpush2.msra.mxu0 0.0
    %1641 = vmatprep.subr.mxu0 0.0
    %1642 = vmatpush2.msra.mxu0 0.0
    %1643 = vmatprep.mubr.f32.mxu0 0.0
    %1644 = vmatmul.mubr.f32.gmra.mxu0 %v1577
    %v1645 = vpop.f32.mrf.mxu0
    %v1646 = vadd.f32 %v1500, %v1645
    %v1647 = vpop.f32.mrf.mxu0
    %1648 = vdwg.mxu0
    %vm1649 = vcmp.gt.f32.partialorder %v1338, %v1293
    %vm1650 = vcmp.gt.f32.partialorder %v1340, %v1300
    %v1651 = vsel %vm1649, %v1338, %v1293
    %v1652 = vsel %vm1650, %v1340, %v1300
    %v1654 = vsel %vm93, %v1651, 0
    %1656 = vmatprep.subr.mxu0 0.0
    %1657 = vmatpush1.msra.mxu0 0.0
    %1658 = vmatprep.subr.mxu0 0.0
    %1659 = vmatpush1.msra.mxu0 0.0
    %1660 = vmatprep.subr.mxu0 0.0
    %1661 = vmatpush1.msra.mxu0 0.0
    %1662 = vmatprep.subr.mxu0 0.0
    %1663 = vmatpush1.msra.mxu0 0.0
    %1664 = vmatprep.subr.mxu0 0.0
    %1665 = vmatpush1.msra.mxu0 0.0
    %1666 = vmatprep.subr.mxu0 0.0
    %1667 = vmatpush1.msra.mxu0 0.0
    %1668 = vmatprep.subr.mxu0 0.0
    %1669 = vmatpush1.msra.mxu0 0.0
    %1670 = vmatprep.subr.mxu0 0.0
    %1671 = vmatpush1.msra.mxu0 0.0
    %1672 = vmatprep.subr.mxu0 0.0
    %1673 = vmatpush1.msra.mxu0 0.0
    %1674 = vmatprep.subr.mxu0 0.0
    %1675 = vmatpush1.msra.mxu0 0.0
    %1676 = vmatprep.subr.mxu0 0.0
    %1677 = vmatpush1.msra.mxu0 0.0
    %1678 = vmatprep.subr.mxu0 0.0
    %1679 = vmatpush1.msra.mxu0 0.0
    %1680 = vmatprep.subr.mxu0 0.0
    %1681 = vmatpush1.msra.mxu0 %v1356
    %1682 = vmatprep.subr.mxu0 0.0
    %1683 = vmatpush1.msra.mxu0 %v1355
    %1684 = vmatprep.subr.mxu0 0.0
    %1685 = vmatpush1.msra.mxu0 %v1354
    %1686 = vmatprep.subr.mxu0 0.0
    %1687 = vmatpush1.msra.mxu0 %v1353
    %1688 = vmatprep.subr.mxu0 0.0
    %1689 = vmatpush2.msra.mxu0 0.0
    %1690 = vmatprep.subr.mxu0 0.0
    %1691 = vmatpush2.msra.mxu0 0.0
    %1692 = vmatprep.subr.mxu0 0.0
    %1693 = vmatpush2.msra.mxu0 0.0
    %1694 = vmatprep.subr.mxu0 0.0
    %1695 = vmatpush2.msra.mxu0 0.0
    %1696 = vmatprep.subr.mxu0 0.0
    %1697 = vmatpush2.msra.mxu0 0.0
    %1698 = vmatprep.subr.mxu0 0.0
    %1699 = vmatpush2.msra.mxu0 0.0
    %1700 = vmatprep.subr.mxu0 0.0
    %1701 = vmatpush2.msra.mxu0 0.0
    %1702 = vmatprep.subr.mxu0 0.0
    %1703 = vmatpush2.msra.mxu0 0.0
    %1704 = vmatprep.subr.mxu0 0.0
    %1705 = vmatpush2.msra.mxu0 0.0
    %1706 = vmatprep.subr.mxu0 0.0
    %1707 = vmatpush2.msra.mxu0 0.0
    %1708 = vmatprep.subr.mxu0 0.0
    %1709 = vmatpush2.msra.mxu0 0.0
    %1710 = vmatprep.subr.mxu0 0.0
    %1711 = vmatpush2.msra.mxu0 0.0
    %1712 = vmatprep.subr.mxu0 0.0
    %1713 = vmatpush2.msra.mxu0 0.0
    %1714 = vmatprep.subr.mxu0 0.0
    %1715 = vmatpush2.msra.mxu0 0.0
    %1716 = vmatprep.subr.mxu0 0.0
    %1717 = vmatpush2.msra.mxu0 0.0
    %1718 = vmatprep.subr.mxu0 0.0
    %1719 = vmatpush2.msra.mxu0 0.0
    %1720 = vmatprep.mubr.f32.mxu0 0.0
    %1721 = vmatmul.mubr.f32.gmra.mxu0 %v1654
    %v1722 = vpop.f32.mrf.mxu0
    %v1723 = vadd.f32 0.0, %v1722
    %v1724 = vpop.f32.mrf.mxu0
    %1725 = vdwg.mxu0
    %v1727 = vsel %vm93, %v1652, 0
    %1729 = vmatprep.subr.mxu0 0.0
    %1730 = vmatpush1.msra.mxu0 0.0
    %1731 = vmatprep.subr.mxu0 0.0
    %1732 = vmatpush1.msra.mxu0 0.0
    %1733 = vmatprep.subr.mxu0 0.0
    %1734 = vmatpush1.msra.mxu0 0.0
    %1735 = vmatprep.subr.mxu0 0.0
    %1736 = vmatpush1.msra.mxu0 0.0
    %1737 = vmatprep.subr.mxu0 0.0
    %1738 = vmatpush1.msra.mxu0 0.0
    %1739 = vmatprep.subr.mxu0 0.0
    %1740 = vmatpush1.msra.mxu0 0.0
    %1741 = vmatprep.subr.mxu0 0.0
    %1742 = vmatpush1.msra.mxu0 0.0
    %1743 = vmatprep.subr.mxu0 0.0
    %1744 = vmatpush1.msra.mxu0 0.0
    %1745 = vmatprep.subr.mxu0 0.0
    %1746 = vmatpush1.msra.mxu0 0.0
    %1747 = vmatprep.subr.mxu0 0.0
    %1748 = vmatpush1.msra.mxu0 0.0
    %1749 = vmatprep.subr.mxu0 0.0
    %1750 = vmatpush1.msra.mxu0 0.0
    %1751 = vmatprep.subr.mxu0 0.0
    %1752 = vmatpush1.msra.mxu0 0.0
    %1753 = vmatprep.subr.mxu0 0.0
    %1754 = vmatpush1.msra.mxu0 %v1356
    %1755 = vmatprep.subr.mxu0 0.0
    %1756 = vmatpush1.msra.mxu0 %v1355
    %1757 = vmatprep.subr.mxu0 0.0
    %1758 = vmatpush1.msra.mxu0 %v1354
    %1759 = vmatprep.subr.mxu0 0.0
    %1760 = vmatpush1.msra.mxu0 %v1353
    %1761 = vmatprep.subr.mxu0 0.0
    %1762 = vmatpush2.msra.mxu0 0.0
    %1763 = vmatprep.subr.mxu0 0.0
    %1764 = vmatpush2.msra.mxu0 0.0
    %1765 = vmatprep.subr.mxu0 0.0
    %1766 = vmatpush2.msra.mxu0 0.0
    %1767 = vmatprep.subr.mxu0 0.0
    %1768 = vmatpush2.msra.mxu0 0.0
    %1769 = vmatprep.subr.mxu0 0.0
    %1770 = vmatpush2.msra.mxu0 0.0
    %1771 = vmatprep.subr.mxu0 0.0
    %1772 = vmatpush2.msra.mxu0 0.0
    %1773 = vmatprep.subr.mxu0 0.0
    %1774 = vmatpush2.msra.mxu0 0.0
    %1775 = vmatprep.subr.mxu0 0.0
    %1776 = vmatpush2.msra.mxu0 0.0
    %1777 = vmatprep.subr.mxu0 0.0
    %1778 = vmatpush2.msra.mxu0 0.0
    %1779 = vmatprep.subr.mxu0 0.0
    %1780 = vmatpush2.msra.mxu0 0.0
    %1781 = vmatprep.subr.mxu0 0.0
    %1782 = vmatpush2.msra.mxu0 0.0
    %1783 = vmatprep.subr.mxu0 0.0
    %1784 = vmatpush2.msra.mxu0 0.0
    %1785 = vmatprep.subr.mxu0 0.0
    %1786 = vmatpush2.msra.mxu0 0.0
    %1787 = vmatprep.subr.mxu0 0.0
    %1788 = vmatpush2.msra.mxu0 0.0
    %1789 = vmatprep.subr.mxu0 0.0
    %1790 = vmatpush2.msra.mxu0 0.0
    %1791 = vmatprep.subr.mxu0 0.0
    %1792 = vmatpush2.msra.mxu0 0.0
    %1793 = vmatprep.mubr.f32.mxu0 0.0
    %1794 = vmatmul.mubr.f32.gmra.mxu0 %v1727
    %v1795 = vpop.f32.mrf.mxu0
    %v1796 = vadd.f32 0.0, %v1795
    %v1797 = vpop.f32.mrf.mxu0
    %1798 = vdwg.mxu0
    %v1799 = vadd.f32 %v1573, %v1723
    %v1800 = vadd.f32 %v1646, %v1796
    %v1801 = vld [vmem:[%s16] sm:$0x1]
    %v1803 = vlaneseq
    %v1804 = vshrl.u32 %v1803, 7
    %v1805 = vsub.s32 0, %v1804
    %v1806 = vrot.slane %v1801, %v1805
    %v1809 = vsel %vm93, %v1244, 0
    %1811 = vmatprep.subr.mxu0 0.0
    %1812 = vmatpush1.msra.mxu0 0.0
    %1813 = vmatprep.subr.mxu0 0.0
    %1814 = vmatpush1.msra.mxu0 0.0
    %1815 = vmatprep.subr.mxu0 0.0
    %1816 = vmatpush1.msra.mxu0 0.0
    %1817 = vmatprep.subr.mxu0 0.0
    %1818 = vmatpush1.msra.mxu0 0.0
    %1819 = vmatprep.subr.mxu0 0.0
    %1820 = vmatpush1.msra.mxu0 0.0
    %1821 = vmatprep.subr.mxu0 0.0
    %1822 = vmatpush1.msra.mxu0 0.0
    %1823 = vmatprep.subr.mxu0 0.0
    %1824 = vmatpush1.msra.mxu0 0.0
    %1825 = vmatprep.subr.mxu0 0.0
    %1826 = vmatpush1.msra.mxu0 0.0
    %1827 = vmatprep.subr.mxu0 0.0
    %1828 = vmatpush1.msra.mxu0 0.0
    %1829 = vmatprep.subr.mxu0 0.0
    %1830 = vmatpush1.msra.mxu0 0.0
    %1831 = vmatprep.subr.mxu0 0.0
    %1832 = vmatpush1.msra.mxu0 0.0
    %1833 = vmatprep.subr.mxu0 0.0
    %1834 = vmatpush1.msra.mxu0 0.0
    %1835 = vmatprep.subr.mxu0 0.0
    %1836 = vmatpush1.msra.mxu0 %v1344
    %1837 = vmatprep.subr.mxu0 0.0
    %1838 = vmatpush1.msra.mxu0 %v1343
    %1839 = vmatprep.subr.mxu0 0.0
    %1840 = vmatpush1.msra.mxu0 %v1342
    %1841 = vmatprep.subr.mxu0 0.0
    %1842 = vmatpush1.msra.mxu0 %v1341
    %1843 = vmatprep.subr.mxu0 0.0
    %1844 = vmatpush2.msra.mxu0 0.0
    %1845 = vmatprep.subr.mxu0 0.0
    %1846 = vmatpush2.msra.mxu0 0.0
    %1847 = vmatprep.subr.mxu0 0.0
    %1848 = vmatpush2.msra.mxu0 0.0
    %1849 = vmatprep.subr.mxu0 0.0
    %1850 = vmatpush2.msra.mxu0 0.0
    %1851 = vmatprep.subr.mxu0 0.0
    %1852 = vmatpush2.msra.mxu0 0.0
    %1853 = vmatprep.subr.mxu0 0.0
    %1854 = vmatpush2.msra.mxu0 0.0
    %1855 = vmatprep.subr.mxu0 0.0
    %1856 = vmatpush2.msra.mxu0 0.0
    %1857 = vmatprep.subr.mxu0 0.0
    %1858 = vmatpush2.msra.mxu0 0.0
    %1859 = vmatprep.subr.mxu0 0.0
    %1860 = vmatpush2.msra.mxu0 0.0
    %1861 = vmatprep.subr.mxu0 0.0
    %1862 = vmatpush2.msra.mxu0 0.0
    %1863 = vmatprep.subr.mxu0 0.0
    %1864 = vmatpush2.msra.mxu0 0.0
    %1865 = vmatprep.subr.mxu0 0.0
    %1866 = vmatpush2.msra.mxu0 0.0
    %1867 = vmatprep.subr.mxu0 0.0
    %1868 = vmatpush2.msra.mxu0 0.0
    %1869 = vmatprep.subr.mxu0 0.0
    %1870 = vmatpush2.msra.mxu0 0.0
    %1871 = vmatprep.subr.mxu0 0.0
    %1872 = vmatpush2.msra.mxu0 0.0
    %1873 = vmatprep.subr.mxu0 0.0
    %1874 = vmatpush2.msra.mxu0 0.0
    %1875 = vmatprep.mubr.f32.mxu0 0.0
    %1876 = vmatmul.mubr.f32.gmra.mxu0 %v1809
    %v1877 = vpop.f32.mrf.mxu0
    %v1878 = vadd.f32 %v1806, %v1877
    %v1879 = vpop.f32.mrf.mxu0
    %1880 = vdwg.mxu0
    %v1882 = vsel %vm93, %v1245, 0
    %1884 = vmatprep.subr.mxu0 0.0
    %1885 = vmatpush1.msra.mxu0 0.0
    %1886 = vmatprep.subr.mxu0 0.0
    %1887 = vmatpush1.msra.mxu0 0.0
    %1888 = vmatprep.subr.mxu0 0.0
    %1889 = vmatpush1.msra.mxu0 0.0
    %1890 = vmatprep.subr.mxu0 0.0
    %1891 = vmatpush1.msra.mxu0 0.0
    %1892 = vmatprep.subr.mxu0 0.0
    %1893 = vmatpush1.msra.mxu0 0.0
    %1894 = vmatprep.subr.mxu0 0.0
    %1895 = vmatpush1.msra.mxu0 0.0
    %1896 = vmatprep.subr.mxu0 0.0
    %1897 = vmatpush1.msra.mxu0 0.0
    %1898 = vmatprep.subr.mxu0 0.0
    %1899 = vmatpush1.msra.mxu0 0.0
    %1900 = vmatprep.subr.mxu0 0.0
    %1901 = vmatpush1.msra.mxu0 0.0
    %1902 = vmatprep.subr.mxu0 0.0
    %1903 = vmatpush1.msra.mxu0 0.0
    %1904 = vmatprep.subr.mxu0 0.0
    %1905 = vmatpush1.msra.mxu0 0.0
    %1906 = vmatprep.subr.mxu0 0.0
    %1907 = vmatpush1.msra.mxu0 0.0
    %1908 = vmatprep.subr.mxu0 0.0
    %1909 = vmatpush1.msra.mxu0 %v1344
    %1910 = vmatprep.subr.mxu0 0.0
    %1911 = vmatpush1.msra.mxu0 %v1343
    %1912 = vmatprep.subr.mxu0 0.0
    %1913 = vmatpush1.msra.mxu0 %v1342
    %1914 = vmatprep.subr.mxu0 0.0
    %1915 = vmatpush1.msra.mxu0 %v1341
    %1916 = vmatprep.subr.mxu0 0.0
    %1917 = vmatpush2.msra.mxu0 0.0
    %1918 = vmatprep.subr.mxu0 0.0
    %1919 = vmatpush2.msra.mxu0 0.0
    %1920 = vmatprep.subr.mxu0 0.0
    %1921 = vmatpush2.msra.mxu0 0.0
    %1922 = vmatprep.subr.mxu0 0.0
    %1923 = vmatpush2.msra.mxu0 0.0
    %1924 = vmatprep.subr.mxu0 0.0
    %1925 = vmatpush2.msra.mxu0 0.0
    %1926 = vmatprep.subr.mxu0 0.0
    %1927 = vmatpush2.msra.mxu0 0.0
    %1928 = vmatprep.subr.mxu0 0.0
    %1929 = vmatpush2.msra.mxu0 0.0
    %1930 = vmatprep.subr.mxu0 0.0
    %1931 = vmatpush2.msra.mxu0 0.0
    %1932 = vmatprep.subr.mxu0 0.0
    %1933 = vmatpush2.msra.mxu0 0.0
    %1934 = vmatprep.subr.mxu0 0.0
    %1935 = vmatpush2.msra.mxu0 0.0
    %1936 = vmatprep.subr.mxu0 0.0
    %1937 = vmatpush2.msra.mxu0 0.0
    %1938 = vmatprep.subr.mxu0 0.0
    %1939 = vmatpush2.msra.mxu0 0.0
    %1940 = vmatprep.subr.mxu0 0.0
    %1941 = vmatpush2.msra.mxu0 0.0
    %1942 = vmatprep.subr.mxu0 0.0
    %1943 = vmatpush2.msra.mxu0 0.0
    %1944 = vmatprep.subr.mxu0 0.0
    %1945 = vmatpush2.msra.mxu0 0.0
    %1946 = vmatprep.subr.mxu0 0.0
    %1947 = vmatpush2.msra.mxu0 0.0
    %1948 = vmatprep.mubr.f32.mxu0 0.0
    %1949 = vmatmul.mubr.f32.gmra.mxu0 %v1882
    %v1950 = vpop.f32.mrf.mxu0
    %v1951 = vadd.f32 %v1806, %v1950
    %v1952 = vpop.f32.mrf.mxu0
    %1953 = vdwg.mxu0
    %v1954 = vlaneseq
    %v1955 = vshrl.u32 %v1954, 7
    %v1956 = vsub.s32 0, %v1955
    %v1957 = vrot.slane %v1799, %v1956
    %v1958 = vlaneseq
    %v1959 = vshrl.u32 %v1958, 7
    %v1960 = vsub.s32 0, %v1959
    %v1961 = vrot.slane %v1800, %v1960
    %v1962 = vadd.f32 %v1878, %v1957
    %v1963 = vadd.f32 %v1951, %v1961
    %vm1964 = vcmp.ge.f32.partialorder %v1962, 0.0
    %vm1965 = vcmp.ge.f32.partialorder %v1963, 0.0
    %v1966 = vmul.f32 %v1962, 0.2
    %v1967 = vmul.f32 %v1963, 0.2
    %v1968 = vsel %vm1964, %v1962, %v1966
    %v1969 = vsel %vm1965, %v1963, %v1967
    %v1970 = vld [vmem:[%s20] sm:$0x1]
    %v1972 = vlaneseq
    %v1973 = vshrl.u32 %v1972, 7
    %v1974 = vsub.s32 0, %v1973
    %v1975 = vrot.slane %v1970, %v1974
    %v1977 = vmul.f32 %v1968, %v1975
    %v1978 = vmul.f32 %v1969, %v1975
    %v1979 = vsel %vm93, %v1977, 0.0
    %1980 = vadd.xlane.f32.xlu0 %v1979
    %v1981 = vpop.xlane.xlu0 %1980
    %v1982 = vsel %vm93, %v1978, 0.0
    %1983 = vadd.xlane.f32.xlu0 %v1982
    %v1984 = vpop.xlane.xlu0 %1983
    %v1985 = vld [vmem:[%s21] sm:$0x1]
    %v1987 = vlaneseq
    %v1988 = vshrl.u32 %v1987, 7
    %v1989 = vsub.s32 0, %v1988
    %v1990 = vrot.slane %v1985, %v1989
    %v1992 = vadd.f32 %v1981, %v1990
    %v1993 = vadd.f32 %v1984, %v1990
    %v1994 = vmul.f32 %v1992, %v1304
    %v1995 = vmul.f32 %v1993, %v1309
    %v1996 = vmul.f32 %v1994, %v699
    %v1997 = vmul.f32 %v1995, %v772
    %v1998 = vsel %vm93, %v1996, 0.0
    %v1999 = vrot.slane %v1998, 4
    %v2000 = vadd.f32 %v1998, %v1999
    %v2001 = vrot.slane %v2000, 2
    %v2002 = vadd.f32 %v2000, %v2001
    %v2003 = vrot.slane %v2002, 1
    %v2004 = vadd.f32 %v2002, %v2003
    %v2005 = vsel %vm93, %v1997, 0.0
    %v2006 = vrot.slane %v2005, 4
    %v2007 = vadd.f32 %v2005, %v2006
    %v2008 = vrot.slane %v2007, 2
    %v2009 = vadd.f32 %v2007, %v2008
    %v2010 = vrot.slane %v2009, 1
    %v2011 = vadd.f32 %v2009, %v2010
    %vm2014 = vcmask 1041409
    %v2015 = vsel %vm2014, %v2011, %v2004
    %2017 = vst.msk [vmem:[#allocation4] sm:$0x3] %vm778, %v2015
    // Predicated region
    $region90: #{model_forward.1} parent=1 // pred_check
      _
    $region91: #{model_forward.1} parent=1 // pred_check_branch
      %2019 = sbr.rel (0) target = $region93
    $region92: #{model_forward.1} parent=1 // pred_region
      %s2021 = ssub.s32 32, 32
      %2022 = vsyncadd [#allocation5], %s2021
      %s2024 = sshll.u32 [#allocation4], 4
      %s2025 = int_to_ptr.vmem [resolvable:$true] %s2024
      %2027 = dma.vmem_to_hbm [thread:$0]  %s2025, 32, %s22, [#allocation5]
    $region93: #{model_forward.1} parent=1 // pred_fallthru
      _
    // Predicated region
    $region94: #{model_forward.1} parent=1 // pred_check
      _
    $region95: #{model_forward.1} parent=1 // pred_check_branch
      %2029 = sbr.rel (0) target = $region97
    $region96: #{model_forward.1} parent=1 // pred_region
      %2030 = dma.done [#allocation5], 32
    $region97: #{model_forward.1} parent=1 // pred_fallthru
      _
    %2031 = vsyncpa [#allocation5], 1

</llo_original>
